<compile_context>
chip_gen: v7x
topology: tpu7x:2x2x1
jax: 0.10.0
libtpu: 0.0.40
codegen_flags: <defaults>
</compile_context>

<pallas_src>
import jax
import jax.numpy as jnp
from jax.experimental import pallas as pl
from jax.experimental.pallas import tpu as pltpu


def resrnn_kernel(x2d_ref, wfused_ref, bfused_ref, whh_ref, bhhn_ref,
                  out2d_ref, hid_ref):
    """One independent (S, B, D) problem per grid step; everything resident in VMEM.

    x2d_ref    : (S*B, D)    time-major input, flattened over (t, b)   [advances with n]
    wfused_ref : (D, 4H)     [W_ih^T (r|z|n) | W_highway^T], 4H = 128  [grid-constant]
    bfused_ref : (1, 4H)     [b_ih_r+b_hh_r | b_ih_z+b_hh_z | b_ih_n | 0]
    whh_ref    : (H, 4H)     W_hh^T zero-padded to a full 128-lane result tile
    bhhn_ref   : (B, 4H)     b_hh_n in lanes [2H, 3H), zero elsewhere (pre-broadcast)
    out2d_ref  : (S*B, 4H)   lane-dense output; lanes [0, H) = gru_out + tanh(highway)
    hid_ref    : (B, 4H)     lane-dense final hidden; lanes [0, H) valid
    """
    SB = x2d_ref.shape[0]
    B = bhhn_ref.shape[0]
    H4 = out2d_ref.shape[-1]
    H = H4 // 4
    S = SB // B

    # ---- Hoisted, time-invariant work: one lane-dense matmul + one tanh block ----
    slab = jnp.dot(x2d_ref[...], wfused_ref[...],
                   preferred_element_type=jnp.float32) + bfused_ref[...]
    hw = jnp.tanh(slab[:, 3 * H:])               # (S*B, H) highway branch, once

    whh = whh_ref[...]                           # (H, 4H)
    bhhn = bhhn_ref[...]                         # (B, 4H)
    pad0 = jnp.zeros((B, 3 * H), jnp.float32)    # hoisted lane padding for 128-lane stores

    # ---- Recurrence: fully unrolled (S is a small static constant) ----
    h = jnp.zeros((B, H), jnp.float32)
    for t in range(S):
        gx = slab[t * B:(t + 1) * B, :]          # (B, 4H) static slice of the slab
        gh = jnp.dot(h, whh, preferred_element_type=jnp.float32) + bhhn
        s = gx + gh                              # full-width VPU add
        rz = jax.nn.sigmoid(s[:, :2 * H])        # r|z in one contiguous 2H-lane block
        r = rz[:, :H]
        z = rz[:, H:]
        n = jnp.tanh(gx[:, 2 * H:3 * H] + r * gh[:, 2 * H:3 * H])
        h = (1.0 - z) * n + z * h                # (B, H)
        # Fused residual + lane-dense, unmasked 128-lane per-step store.
        out2d_ref[t * B:(t + 1) * B, :] = jnp.concatenate(
            [h + hw[t * B:(t + 1) * B, :], pad0], axis=1)

    hid_ref[...] = jnp.concatenate([h, pad0], axis=1)


def res_rnn_forward_batched(xs, w_highway, w_ih, w_hh, b_ih, b_hh):
    """xs: (N, S, B, D) — N independent sequences sharing the same parameters.

    Weights follow the PyTorch convention:
      w_highway: (H, D), w_ih: (3H, D), w_hh: (3H, H), b_ih/b_hh: (3H,).
    Returns (out, hidden): out (N, S, B, H), hidden (N, B, H).
    """
    N, S, B, D = xs.shape
    H = w_hh.shape[1]
    H4 = 4 * H
    assert w_highway.shape[0] == H, "non-bidirectional: hidden_size == hidden"
    # The original module's view(batch, -1, H) + residual add requires S == B.
    assert S == B, "resRnn forward is only shape-legal when seq_len == batch"

    f32 = jnp.float32
    x2d = xs.reshape(N, S * B, D).astype(f32)

    # Fused time-invariant weight: [W_ih^T | W_highway^T] -> (D, 4H) (4H = 128 lanes).
    w_fused = jnp.concatenate([w_ih.T, w_highway.T], axis=1).astype(f32)
    # Fold b_ih (all gates) and b_hh (r, z gates only) into the precomputed slab bias.
    b_gx = jnp.concatenate([b_ih[:2 * H] + b_hh[:2 * H], b_ih[2 * H:]]).astype(f32)
    b_fused = jnp.concatenate([b_gx, jnp.zeros((H,), f32)])[None, :]        # (1, 4H)
    # W_hh^T zero-padded so the recurrent matmul result is a full 128-lane tile.
    w_hh_pad = jnp.pad(w_hh.T.astype(f32), ((0, 0), (0, H)))                # (H, 4H)
    # b_hh for the n gate only (stays inside the loop: it is multiplied by r),
    # pre-broadcast to (B, 4H) so the kernel does no per-step broadcast.
    bhhn = jnp.concatenate([jnp.zeros((2 * H,), f32),
                            b_hh[2 * H:].astype(f32),
                            jnp.zeros((H,), f32)])
    bhhn_b = jnp.tile(bhhn[None, :], (B, 1))                                # (B, 4H)

    out2d, hid = pl.pallas_call(
        resrnn_kernel,
        out_shape=(jax.ShapeDtypeStruct((N, S * B, H4), f32),
                   jax.ShapeDtypeStruct((N, B, H4), f32)),
        grid=(N,),
        in_specs=[
            # Per-problem input stream: block advances with the grid index.
            pl.BlockSpec((None, S * B, D), lambda n: (n, 0, 0)),
            # Grid-constant weights/biases: DMA'd once, stay VMEM-resident.
            pl.BlockSpec((D, H4), lambda n: (0, 0)),
            pl.BlockSpec((1, H4), lambda n: (0, 0)),
            pl.BlockSpec((H, H4), lambda n: (0, 0)),
            pl.BlockSpec((B, H4), lambda n: (0, 0)),
        ],
        out_specs=(
            pl.BlockSpec((None, S * B, H4), lambda n: (n, 0, 0)),
            pl.BlockSpec((None, B, H4), lambda n: (n, 0, 0)),
        ),
        compiler_params=pltpu.CompilerParams(dimension_semantics=("parallel",)),
    )(x2d, w_fused, b_fused, w_hh_pad, bhhn_b)

    # Free XLA slices/reshapes back to the PyTorch output shapes.
    out = out2d[..., :H].reshape(N, S, B, H)
    hidden = hid[..., :H]                     # (N, B, H)
    return out, hidden


def res_rnn_forward(x, w_highway, w_ih, w_hh, b_ih, b_hh):
    """Single-problem module forward: x (S, B, D) -> (out (S, B, H), hidden (1, B, H))."""
    out, hidden = res_rnn_forward_batched(x[None], w_highway, w_ih, w_hh, b_ih, b_hh)
    return out[0], hidden   # hidden is (1, B, H) == (n_layers * num_directions, B, H)


def reference_forward(x, w_highway, w_ih, w_hh, b_ih, b_hh):
    """Pure-JAX reference reproducing the PyTorch forward verbatim."""
    S, B, D = x.shape
    H = w_highway.shape[0]
    hw = jnp.tanh(x.reshape(-1, D) @ w_highway.T).reshape(B, -1, H)
    h = jnp.zeros((B, H), jnp.float32)
    outs = []
    for t in range(S):
        gx = x[t] @ w_ih.T + b_ih
        gh = h @ w_hh.T + b_hh
        r = jax.nn.sigmoid(gx[:, :H] + gh[:, :H])
        z = jax.nn.sigmoid(gx[:, H:2 * H] + gh[:, H:2 * H])
        n = jnp.tanh(gx[:, 2 * H:] + r * gh[:, 2 * H:])
        h = (1.0 - z) * n + z * h
        outs.append(h)
    gru_out = jnp.stack(outs)          # (S, B, H)
    return gru_out + hw, h[None]       # residual add (requires S == B)


if __name__ == "__main__":
    # Small shapes consistent with the module (seq == batch, see note above).
    SEQ, BATCH, INPUT_DIM, HIDDEN = 8, 8, 16, 32
    N_LAYERS, BI_LSTM = 1, False
    HIDDEN_SIZE = HIDDEN * 2 if BI_LSTM else HIDDEN
    N_PROB = 4   # independent problems batched over the parallel grid axis

    key = jax.random.PRNGKey(0)
    kx, kw, k1, k2, k3, k4 = jax.random.split(key, 6)

    xs = jax.random.normal(kx, (N_PROB, SEQ, BATCH, INPUT_DIM), jnp.float32)
    # Deterministic synthetic parameters (shapes follow nn.Linear / nn.GRU).
    scale = 1.0 / jnp.sqrt(HIDDEN)
    w_highway = jax.random.uniform(kw, (HIDDEN_SIZE, INPUT_DIM), jnp.float32,
                                   -scale, scale)
    w_ih = jax.random.uniform(k1, (3 * HIDDEN, INPUT_DIM), jnp.float32, -scale, scale)
    w_hh = jax.random.uniform(k2, (3 * HIDDEN, HIDDEN), jnp.float32, -scale, scale)
    b_ih = jax.random.uniform(k3, (3 * HIDDEN,), jnp.float32, -scale, scale)
    b_hh = jax.random.uniform(k4, (3 * HIDDEN,), jnp.float32, -scale, scale)

    # Batched path: N independent problems through the parallel grid axis.
    outs, hids = jax.block_until_ready(
        res_rnn_forward_batched(xs, w_highway, w_ih, w_hh, b_ih, b_hh))
    assert outs.shape == (N_PROB, SEQ, BATCH, HIDDEN_SIZE)
    assert hids.shape == (N_PROB, BATCH, HIDDEN)
    for i in range(N_PROB):
        ref_out, ref_hid = reference_forward(xs[i], w_highway, w_ih, w_hh, b_ih, b_hh)
        assert jnp.allclose(outs[i], ref_out, atol=1e-5, rtol=1e-5)
        assert jnp.allclose(hids[i], ref_hid[0], atol=1e-5, rtol=1e-5)

    # Single-problem path (the PyTorch module's forward signature), N = 1 grid.
    out, hidden = jax.block_until_ready(
        res_rnn_forward(xs[0], w_highway, w_ih, w_hh, b_ih, b_hh))
    ref_out, ref_hidden = reference_forward(xs[0], w_highway, w_ih, w_hh, b_ih, b_hh)
    assert out.shape == (SEQ, BATCH, HIDDEN_SIZE)
    assert hidden.shape == (N_LAYERS * (2 if BI_LSTM else 1), BATCH, HIDDEN)
    assert jnp.allclose(out, ref_out, atol=1e-5, rtol=1e-5)
    assert jnp.allclose(hidden, ref_hidden, atol=1e-5, rtol=1e-5)

    print("KERNEL_OK")
</pallas_src>

<mosaic_0001>
module attributes {stable_mosaic.version = 11 : i64} {
  func.func @resrnn_kernel(%arg0: i32, %arg1: memref<1x64x16xf32, #tpu.memory_space<vmem>>, %arg2: memref<16x128xf32, #tpu.memory_space<vmem>>, %arg3: memref<1x128xf32, #tpu.memory_space<vmem>>, %arg4: memref<32x128xf32, #tpu.memory_space<vmem>>, %arg5: memref<8x128xf32, #tpu.memory_space<vmem>>, %arg6: memref<1x64x128xf32, #tpu.memory_space<vmem>>, %arg7: memref<1x8x128xf32, #tpu.memory_space<vmem>>) attributes {dimension_semantics = [#tpu.dimension_semantics<parallel>], iteration_bounds = array<i64: 4>, scalar_prefetch = 0 : i64, scratch_operands = 0 : i64, tpu.core_type = #tpu.core_type<tc>, window_params = [{transform_indices = @transform_0, window_bounds = array<i64: 1, 64, 16>}, {pipeline_mode = #tpu.pipeline_mode<synchronous>, transform_indices = @transform_1, window_bounds = array<i64: 16, 128>}, {pipeline_mode = #tpu.pipeline_mode<synchronous>, transform_indices = @transform_2, window_bounds = array<i64: 1, 128>}, {pipeline_mode = #tpu.pipeline_mode<synchronous>, transform_indices = @transform_3, window_bounds = array<i64: 32, 128>}, {pipeline_mode = #tpu.pipeline_mode<synchronous>, transform_indices = @transform_4, window_bounds = array<i64: 8, 128>}, {transform_indices = @transform_5, window_bounds = array<i64: 1, 64, 128>}, {transform_indices = @transform_6, window_bounds = array<i64: 1, 8, 128>}]} {
    %c0 = arith.constant 0 : index
    %c0_0 = arith.constant 0 : index
    %c0_1 = arith.constant 0 : index
    %0 = vector.load %arg1[%c0, %c0_0, %c0_1] : memref<1x64x16xf32, #tpu.memory_space<vmem>>, vector<1x64x16xf32>
    %1 = vector.shape_cast %0 : vector<1x64x16xf32> to vector<64x16xf32>
    %c0_2 = arith.constant 0 : index
    %c0_3 = arith.constant 0 : index
    %2 = vector.load %arg2[%c0_2, %c0_3] : memref<16x128xf32, #tpu.memory_space<vmem>>, vector<16x128xf32>
    %cst = arith.constant dense<0.000000e+00> : vector<64x128xf32>
    %3 = tpu.matmul %1, %2, %cst {dimension_numbers = #tpu.dot_dimension_numbers<[1], [0], [0], [1], [0, 0, 1, 1], [], []>} : vector<64x16xf32>, vector<16x128xf32>, vector<64x128xf32> -> vector<64x128xf32>
    %c0_4 = arith.constant 0 : index
    %c0_5 = arith.constant 0 : index
    %4 = vector.load %arg3[%c0_4, %c0_5] : memref<1x128xf32, #tpu.memory_space<vmem>>, vector<1x128xf32>
    %5 = vector.broadcast %4 : vector<1x128xf32> to vector<64x128xf32>
    %6 = arith.addf %3, %5 : vector<64x128xf32>
    %7 = vector.extract_strided_slice %6 {offsets = [0, 96], sizes = [64, 32], strides = [1, 1]} : vector<64x128xf32> to vector<64x32xf32>
    %8 = math.tanh %7 : vector<64x32xf32>
    %c0_6 = arith.constant 0 : index
    %c0_7 = arith.constant 0 : index
    %9 = vector.load %arg4[%c0_6, %c0_7] : memref<32x128xf32, #tpu.memory_space<vmem>>, vector<32x128xf32>
    %c0_8 = arith.constant 0 : index
    %c0_9 = arith.constant 0 : index
    %10 = vector.load %arg5[%c0_8, %c0_9] : memref<8x128xf32, #tpu.memory_space<vmem>>, vector<8x128xf32>
    %cst_10 = arith.constant 0.000000e+00 : f32
    %11 = vector.broadcast %cst_10 : f32 to vector<8x96xf32>
    %cst_11 = arith.constant 0.000000e+00 : f32
    %12 = vector.broadcast %cst_11 : f32 to vector<8x32xf32>
    %13 = vector.extract_strided_slice %6 {offsets = [0, 0], sizes = [8, 128], strides = [1, 1]} : vector<64x128xf32> to vector<8x128xf32>
    %cst_12 = arith.constant dense<0.000000e+00> : vector<8x128xf32>
    %14 = tpu.matmul %12, %9, %cst_12 {dimension_numbers = #tpu.dot_dimension_numbers<[1], [0], [0], [1], [0, 0, 1, 1], [], []>} : vector<8x32xf32>, vector<32x128xf32>, vector<8x128xf32> -> vector<8x128xf32>
    %15 = arith.addf %14, %10 : vector<8x128xf32>
    %16 = arith.addf %13, %15 : vector<8x128xf32>
    %17 = vector.extract_strided_slice %16 {offsets = [0, 0], sizes = [8, 64], strides = [1, 1]} : vector<8x128xf32> to vector<8x64xf32>
    %18 = arith.negf %17 : vector<8x64xf32>
    %19 = math.exp %18 : vector<8x64xf32>
    %cst_13 = arith.constant 1.000000e+00 : f32
    %20 = vector.broadcast %cst_13 : f32 to vector<8x64xf32>
    %21 = arith.addf %20, %19 : vector<8x64xf32>
    %22 = arith.divf %20, %21 : vector<8x64xf32>
    %23 = vector.extract_strided_slice %22 {offsets = [0, 0], sizes = [8, 32], strides = [1, 1]} : vector<8x64xf32> to vector<8x32xf32>
    %24 = vector.extract_strided_slice %22 {offsets = [0, 32], sizes = [8, 32], strides = [1, 1]} : vector<8x64xf32> to vector<8x32xf32>
    %25 = vector.extract_strided_slice %13 {offsets = [0, 64], sizes = [8, 32], strides = [1, 1]} : vector<8x128xf32> to vector<8x32xf32>
    %26 = vector.extract_strided_slice %15 {offsets = [0, 64], sizes = [8, 32], strides = [1, 1]} : vector<8x128xf32> to vector<8x32xf32>
    %27 = arith.mulf %23, %26 : vector<8x32xf32>
    %28 = arith.addf %25, %27 : vector<8x32xf32>
    %29 = math.tanh %28 : vector<8x32xf32>
    %cst_14 = arith.constant 1.000000e+00 : f32
    %30 = vector.broadcast %cst_14 : f32 to vector<8x32xf32>
    %31 = arith.subf %30, %24 : vector<8x32xf32>
    %32 = arith.mulf %31, %29 : vector<8x32xf32>
    %33 = arith.mulf %24, %12 : vector<8x32xf32>
    %34 = arith.addf %32, %33 : vector<8x32xf32>
    %35 = vector.extract_strided_slice %8 {offsets = [0, 0], sizes = [8, 32], strides = [1, 1]} : vector<64x32xf32> to vector<8x32xf32>
    %36 = arith.addf %34, %35 : vector<8x32xf32>
    %37 = tpu.concatenate %36, %11 in 1 : vector<8x32xf32>, vector<8x96xf32> -> vector<8x128xf32>
    %c0_15 = arith.constant 0 : index
    %c0_16 = arith.constant 0 : index
    %c0_17 = arith.constant 0 : index
    %38 = vector.load %arg6[%c0_15, %c0_16, %c0_17] : memref<1x64x128xf32, #tpu.memory_space<vmem>>, vector<1x8x128xf32>
    %39 = vector.shape_cast %38 : vector<1x8x128xf32> to vector<8x128xf32>
    %40 = vector.shape_cast %37 : vector<8x128xf32> to vector<1x8x128xf32>
    tpu.vector_store %arg6[%c0_15, %c0_16, %c0_17], %40 {strides = array<i32>} : memref<1x64x128xf32, #tpu.memory_space<vmem>>, vector<1x8x128xf32>,
    %41 = vector.extract_strided_slice %6 {offsets = [8, 0], sizes = [8, 128], strides = [1, 1]} : vector<64x128xf32> to vector<8x128xf32>
    %cst_18 = arith.constant dense<0.000000e+00> : vector<8x128xf32>
    %42 = tpu.matmul %34, %9, %cst_18 {dimension_numbers = #tpu.dot_dimension_numbers<[1], [0], [0], [1], [0, 0, 1, 1], [], []>} : vector<8x32xf32>, vector<32x128xf32>, vector<8x128xf32> -> vector<8x128xf32>
    %43 = arith.addf %42, %10 : vector<8x128xf32>
    %44 = arith.addf %41, %43 : vector<8x128xf32>
    %45 = vector.extract_strided_slice %44 {offsets = [0, 0], sizes = [8, 64], strides = [1, 1]} : vector<8x128xf32> to vector<8x64xf32>
    %46 = arith.negf %45 : vector<8x64xf32>
    %47 = math.exp %46 : vector<8x64xf32>
    %cst_19 = arith.constant 1.000000e+00 : f32
    %48 = vector.broadcast %cst_19 : f32 to vector<8x64xf32>
    %49 = arith.addf %48, %47 : vector<8x64xf32>
    %50 = arith.divf %48, %49 : vector<8x64xf32>
    %51 = vector.extract_strided_slice %50 {offsets = [0, 0], sizes = [8, 32], strides = [1, 1]} : vector<8x64xf32> to vector<8x32xf32>
    %52 = vector.extract_strided_slice %50 {offsets = [0, 32], sizes = [8, 32], strides = [1, 1]} : vector<8x64xf32> to vector<8x32xf32>
    %53 = vector.extract_strided_slice %41 {offsets = [0, 64], sizes = [8, 32], strides = [1, 1]} : vector<8x128xf32> to vector<8x32xf32>
    %54 = vector.extract_strided_slice %43 {offsets = [0, 64], sizes = [8, 32], strides = [1, 1]} : vector<8x128xf32> to vector<8x32xf32>
    %55 = arith.mulf %51, %54 : vector<8x32xf32>
    %56 = arith.addf %53, %55 : vector<8x32xf32>
    %57 = math.tanh %56 : vector<8x32xf32>
    %cst_20 = arith.constant 1.000000e+00 : f32
    %58 = vector.broadcast %cst_20 : f32 to vector<8x32xf32>
    %59 = arith.subf %58, %52 : vector<8x32xf32>
    %60 = arith.mulf %59, %57 : vector<8x32xf32>
    %61 = arith.mulf %52, %34 : vector<8x32xf32>
    %62 = arith.addf %60, %61 : vector<8x32xf32>
    %63 = vector.extract_strided_slice %8 {offsets = [8, 0], sizes = [8, 32], strides = [1, 1]} : vector<64x32xf32> to vector<8x32xf32>
    %64 = arith.addf %62, %63 : vector<8x32xf32>
    %65 = tpu.concatenate %64, %11 in 1 : vector<8x32xf32>, vector<8x96xf32> -> vector<8x128xf32>
    %c0_21 = arith.constant 0 : index
    %c8 = arith.constant 8 : index
    %c0_22 = arith.constant 0 : index
    %66 = vector.load %arg6[%c0_21, %c8, %c0_22] : memref<1x64x128xf32, #tpu.memory_space<vmem>>, vector<1x8x128xf32>
    %67 = vector.shape_cast %66 : vector<1x8x128xf32> to vector<8x128xf32>
    %68 = vector.shape_cast %65 : vector<8x128xf32> to vector<1x8x128xf32>
    tpu.vector_store %arg6[%c0_21, %c8, %c0_22], %68 {strides = array<i32>} : memref<1x64x128xf32, #tpu.memory_space<vmem>>, vector<1x8x128xf32>,
    %69 = vector.extract_strided_slice %6 {offsets = [16, 0], sizes = [8, 128], strides = [1, 1]} : vector<64x128xf32> to vector<8x128xf32>
    %cst_23 = arith.constant dense<0.000000e+00> : vector<8x128xf32>
    %70 = tpu.matmul %62, %9, %cst_23 {dimension_numbers = #tpu.dot_dimension_numbers<[1], [0], [0], [1], [0, 0, 1, 1], [], []>} : vector<8x32xf32>, vector<32x128xf32>, vector<8x128xf32> -> vector<8x128xf32>
    %71 = arith.addf %70, %10 : vector<8x128xf32>
    %72 = arith.addf %69, %71 : vector<8x128xf32>
    %73 = vector.extract_strided_slice %72 {offsets = [0, 0], sizes = [8, 64], strides = [1, 1]} : vector<8x128xf32> to vector<8x64xf32>
    %74 = arith.negf %73 : vector<8x64xf32>
    %75 = math.exp %74 : vector<8x64xf32>
    %cst_24 = arith.constant 1.000000e+00 : f32
    %76 = vector.broadcast %cst_24 : f32 to vector<8x64xf32>
    %77 = arith.addf %76, %75 : vector<8x64xf32>
    %78 = arith.divf %76, %77 : vector<8x64xf32>
    %79 = vector.extract_strided_slice %78 {offsets = [0, 0], sizes = [8, 32], strides = [1, 1]} : vector<8x64xf32> to vector<8x32xf32>
    %80 = vector.extract_strided_slice %78 {offsets = [0, 32], sizes = [8, 32], strides = [1, 1]} : vector<8x64xf32> to vector<8x32xf32>
    %81 = vector.extract_strided_slice %69 {offsets = [0, 64], sizes = [8, 32], strides = [1, 1]} : vector<8x128xf32> to vector<8x32xf32>
    %82 = vector.extract_strided_slice %71 {offsets = [0, 64], sizes = [8, 32], strides = [1, 1]} : vector<8x128xf32> to vector<8x32xf32>
    %83 = arith.mulf %79, %82 : vector<8x32xf32>
    %84 = arith.addf %81, %83 : vector<8x32xf32>
    %85 = math.tanh %84 : vector<8x32xf32>
    %cst_25 = arith.constant 1.000000e+00 : f32
    %86 = vector.broadcast %cst_25 : f32 to vector<8x32xf32>
    %87 = arith.subf %86, %80 : vector<8x32xf32>
    %88 = arith.mulf %87, %85 : vector<8x32xf32>
    %89 = arith.mulf %80, %62 : vector<8x32xf32>
    %90 = arith.addf %88, %89 : vector<8x32xf32>
    %91 = vector.extract_strided_slice %8 {offsets = [16, 0], sizes = [8, 32], strides = [1, 1]} : vector<64x32xf32> to vector<8x32xf32>
    %92 = arith.addf %90, %91 : vector<8x32xf32>
    %93 = tpu.concatenate %92, %11 in 1 : vector<8x32xf32>, vector<8x96xf32> -> vector<8x128xf32>
    %c0_26 = arith.constant 0 : index
    %c16 = arith.constant 16 : index
    %c0_27 = arith.constant 0 : index
    %94 = vector.load %arg6[%c0_26, %c16, %c0_27] : memref<1x64x128xf32, #tpu.memory_space<vmem>>, vector<1x8x128xf32>
    %95 = vector.shape_cast %94 : vector<1x8x128xf32> to vector<8x128xf32>
    %96 = vector.shape_cast %93 : vector<8x128xf32> to vector<1x8x128xf32>
    tpu.vector_store %arg6[%c0_26, %c16, %c0_27], %96 {strides = array<i32>} : memref<1x64x128xf32, #tpu.memory_space<vmem>>, vector<1x8x128xf32>,
    %97 = vector.extract_strided_slice %6 {offsets = [24, 0], sizes = [8, 128], strides = [1, 1]} : vector<64x128xf32> to vector<8x128xf32>
    %cst_28 = arith.constant dense<0.000000e+00> : vector<8x128xf32>
    %98 = tpu.matmul %90, %9, %cst_28 {dimension_numbers = #tpu.dot_dimension_numbers<[1], [0], [0], [1], [0, 0, 1, 1], [], []>} : vector<8x32xf32>, vector<32x128xf32>, vector<8x128xf32> -> vector<8x128xf32>
    %99 = arith.addf %98, %10 : vector<8x128xf32>
    %100 = arith.addf %97, %99 : vector<8x128xf32>
    %101 = vector.extract_strided_slice %100 {offsets = [0, 0], sizes = [8, 64], strides = [1, 1]} : vector<8x128xf32> to vector<8x64xf32>
    %102 = arith.negf %101 : vector<8x64xf32>
    %103 = math.exp %102 : vector<8x64xf32>
    %cst_29 = arith.constant 1.000000e+00 : f32
    %104 = vector.broadcast %cst_29 : f32 to vector<8x64xf32>
    %105 = arith.addf %104, %103 : vector<8x64xf32>
    %106 = arith.divf %104, %105 : vector<8x64xf32>
    %107 = vector.extract_strided_slice %106 {offsets = [0, 0], sizes = [8, 32], strides = [1, 1]} : vector<8x64xf32> to vector<8x32xf32>
    %108 = vector.extract_strided_slice %106 {offsets = [0, 32], sizes = [8, 32], strides = [1, 1]} : vector<8x64xf32> to vector<8x32xf32>
    %109 = vector.extract_strided_slice %97 {offsets = [0, 64], sizes = [8, 32], strides = [1, 1]} : vector<8x128xf32> to vector<8x32xf32>
    %110 = vector.extract_strided_slice %99 {offsets = [0, 64], sizes = [8, 32], strides = [1, 1]} : vector<8x128xf32> to vector<8x32xf32>
    %111 = arith.mulf %107, %110 : vector<8x32xf32>
    %112 = arith.addf %109, %111 : vector<8x32xf32>
    %113 = math.tanh %112 : vector<8x32xf32>
    %cst_30 = arith.constant 1.000000e+00 : f32
    %114 = vector.broadcast %cst_30 : f32 to vector<8x32xf32>
    %115 = arith.subf %114, %108 : vector<8x32xf32>
    %116 = arith.mulf %115, %113 : vector<8x32xf32>
    %117 = arith.mulf %108, %90 : vector<8x32xf32>
    %118 = arith.addf %116, %117 : vector<8x32xf32>
    %119 = vector.extract_strided_slice %8 {offsets = [24, 0], sizes = [8, 32], strides = [1, 1]} : vector<64x32xf32> to vector<8x32xf32>
    %120 = arith.addf %118, %119 : vector<8x32xf32>
    %121 = tpu.concatenate %120, %11 in 1 : vector<8x32xf32>, vector<8x96xf32> -> vector<8x128xf32>
    %c0_31 = arith.constant 0 : index
    %c24 = arith.constant 24 : index
    %c0_32 = arith.constant 0 : index
    %122 = vector.load %arg6[%c0_31, %c24, %c0_32] : memref<1x64x128xf32, #tpu.memory_space<vmem>>, vector<1x8x128xf32>
    %123 = vector.shape_cast %122 : vector<1x8x128xf32> to vector<8x128xf32>
    %124 = vector.shape_cast %121 : vector<8x128xf32> to vector<1x8x128xf32>
    tpu.vector_store %arg6[%c0_31, %c24, %c0_32], %124 {strides = array<i32>} : memref<1x64x128xf32, #tpu.memory_space<vmem>>, vector<1x8x128xf32>,
    %125 = vector.extract_strided_slice %6 {offsets = [32, 0], sizes = [8, 128], strides = [1, 1]} : vector<64x128xf32> to vector<8x128xf32>
    %cst_33 = arith.constant dense<0.000000e+00> : vector<8x128xf32>
    %126 = tpu.matmul %118, %9, %cst_33 {dimension_numbers = #tpu.dot_dimension_numbers<[1], [0], [0], [1], [0, 0, 1, 1], [], []>} : vector<8x32xf32>, vector<32x128xf32>, vector<8x128xf32> -> vector<8x128xf32>
    %127 = arith.addf %126, %10 : vector<8x128xf32>
    %128 = arith.addf %125, %127 : vector<8x128xf32>
    %129 = vector.extract_strided_slice %128 {offsets = [0, 0], sizes = [8, 64], strides = [1, 1]} : vector<8x128xf32> to vector<8x64xf32>
    %130 = arith.negf %129 : vector<8x64xf32>
    %131 = math.exp %130 : vector<8x64xf32>
    %cst_34 = arith.constant 1.000000e+00 : f32
    %132 = vector.broadcast %cst_34 : f32 to vector<8x64xf32>
    %133 = arith.addf %132, %131 : vector<8x64xf32>
    %134 = arith.divf %132, %133 : vector<8x64xf32>
    %135 = vector.extract_strided_slice %134 {offsets = [0, 0], sizes = [8, 32], strides = [1, 1]} : vector<8x64xf32> to vector<8x32xf32>
    %136 = vector.extract_strided_slice %134 {offsets = [0, 32], sizes = [8, 32], strides = [1, 1]} : vector<8x64xf32> to vector<8x32xf32>
    %137 = vector.extract_strided_slice %125 {offsets = [0, 64], sizes = [8, 32], strides = [1, 1]} : vector<8x128xf32> to vector<8x32xf32>
    %138 = vector.extract_strided_slice %127 {offsets = [0, 64], sizes = [8, 32], strides = [1, 1]} : vector<8x128xf32> to vector<8x32xf32>
    %139 = arith.mulf %135, %138 : vector<8x32xf32>
    %140 = arith.addf %137, %139 : vector<8x32xf32>
    %141 = math.tanh %140 : vector<8x32xf32>
    %cst_35 = arith.constant 1.000000e+00 : f32
    %142 = vector.broadcast %cst_35 : f32 to vector<8x32xf32>
    %143 = arith.subf %142, %136 : vector<8x32xf32>
    %144 = arith.mulf %143, %141 : vector<8x32xf32>
    %145 = arith.mulf %136, %118 : vector<8x32xf32>
    %146 = arith.addf %144, %145 : vector<8x32xf32>
    %147 = vector.extract_strided_slice %8 {offsets = [32, 0], sizes = [8, 32], strides = [1, 1]} : vector<64x32xf32> to vector<8x32xf32>
    %148 = arith.addf %146, %147 : vector<8x32xf32>
    %149 = tpu.concatenate %148, %11 in 1 : vector<8x32xf32>, vector<8x96xf32> -> vector<8x128xf32>
    %c0_36 = arith.constant 0 : index
    %c32 = arith.constant 32 : index
    %c0_37 = arith.constant 0 : index
    %150 = vector.load %arg6[%c0_36, %c32, %c0_37] : memref<1x64x128xf32, #tpu.memory_space<vmem>>, vector<1x8x128xf32>
    %151 = vector.shape_cast %150 : vector<1x8x128xf32> to vector<8x128xf32>
    %152 = vector.shape_cast %149 : vector<8x128xf32> to vector<1x8x128xf32>
    tpu.vector_store %arg6[%c0_36, %c32, %c0_37], %152 {strides = array<i32>} : memref<1x64x128xf32, #tpu.memory_space<vmem>>, vector<1x8x128xf32>,
    %153 = vector.extract_strided_slice %6 {offsets = [40, 0], sizes = [8, 128], strides = [1, 1]} : vector<64x128xf32> to vector<8x128xf32>
    %cst_38 = arith.constant dense<0.000000e+00> : vector<8x128xf32>
    %154 = tpu.matmul %146, %9, %cst_38 {dimension_numbers = #tpu.dot_dimension_numbers<[1], [0], [0], [1], [0, 0, 1, 1], [], []>} : vector<8x32xf32>, vector<32x128xf32>, vector<8x128xf32> -> vector<8x128xf32>
    %155 = arith.addf %154, %10 : vector<8x128xf32>
    %156 = arith.addf %153, %155 : vector<8x128xf32>
    %157 = vector.extract_strided_slice %156 {offsets = [0, 0], sizes = [8, 64], strides = [1, 1]} : vector<8x128xf32> to vector<8x64xf32>
    %158 = arith.negf %157 : vector<8x64xf32>
    %159 = math.exp %158 : vector<8x64xf32>
    %cst_39 = arith.constant 1.000000e+00 : f32
    %160 = vector.broadcast %cst_39 : f32 to vector<8x64xf32>
    %161 = arith.addf %160, %159 : vector<8x64xf32>
    %162 = arith.divf %160, %161 : vector<8x64xf32>
    %163 = vector.extract_strided_slice %162 {offsets = [0, 0], sizes = [8, 32], strides = [1, 1]} : vector<8x64xf32> to vector<8x32xf32>
    %164 = vector.extract_strided_slice %162 {offsets = [0, 32], sizes = [8, 32], strides = [1, 1]} : vector<8x64xf32> to vector<8x32xf32>
    %165 = vector.extract_strided_slice %153 {offsets = [0, 64], sizes = [8, 32], strides = [1, 1]} : vector<8x128xf32> to vector<8x32xf32>
    %166 = vector.extract_strided_slice %155 {offsets = [0, 64], sizes = [8, 32], strides = [1, 1]} : vector<8x128xf32> to vector<8x32xf32>
    %167 = arith.mulf %163, %166 : vector<8x32xf32>
    %168 = arith.addf %165, %167 : vector<8x32xf32>
    %169 = math.tanh %168 : vector<8x32xf32>
    %cst_40 = arith.constant 1.000000e+00 : f32
    %170 = vector.broadcast %cst_40 : f32 to vector<8x32xf32>
    %171 = arith.subf %170, %164 : vector<8x32xf32>
    %172 = arith.mulf %171, %169 : vector<8x32xf32>
    %173 = arith.mulf %164, %146 : vector<8x32xf32>
    %174 = arith.addf %172, %173 : vector<8x32xf32>
    %175 = vector.extract_strided_slice %8 {offsets = [40, 0], sizes = [8, 32], strides = [1, 1]} : vector<64x32xf32> to vector<8x32xf32>
    %176 = arith.addf %174, %175 : vector<8x32xf32>
    %177 = tpu.concatenate %176, %11 in 1 : vector<8x32xf32>, vector<8x96xf32> -> vector<8x128xf32>
    %c0_41 = arith.constant 0 : index
    %c40 = arith.constant 40 : index
    %c0_42 = arith.constant 0 : index
    %178 = vector.load %arg6[%c0_41, %c40, %c0_42] : memref<1x64x128xf32, #tpu.memory_space<vmem>>, vector<1x8x128xf32>
    %179 = vector.shape_cast %178 : vector<1x8x128xf32> to vector<8x128xf32>
    %180 = vector.shape_cast %177 : vector<8x128xf32> to vector<1x8x128xf32>
    tpu.vector_store %arg6[%c0_41, %c40, %c0_42], %180 {strides = array<i32>} : memref<1x64x128xf32, #tpu.memory_space<vmem>>, vector<1x8x128xf32>,
    %181 = vector.extract_strided_slice %6 {offsets = [48, 0], sizes = [8, 128], strides = [1, 1]} : vector<64x128xf32> to vector<8x128xf32>
    %cst_43 = arith.constant dense<0.000000e+00> : vector<8x128xf32>
    %182 = tpu.matmul %174, %9, %cst_43 {dimension_numbers = #tpu.dot_dimension_numbers<[1], [0], [0], [1], [0, 0, 1, 1], [], []>} : vector<8x32xf32>, vector<32x128xf32>, vector<8x128xf32> -> vector<8x128xf32>
    %183 = arith.addf %182, %10 : vector<8x128xf32>
    %184 = arith.addf %181, %183 : vector<8x128xf32>
    %185 = vector.extract_strided_slice %184 {offsets = [0, 0], sizes = [8, 64], strides = [1, 1]} : vector<8x128xf32> to vector<8x64xf32>
    %186 = arith.negf %185 : vector<8x64xf32>
    %187 = math.exp %186 : vector<8x64xf32>
    %cst_44 = arith.constant 1.000000e+00 : f32
    %188 = vector.broadcast %cst_44 : f32 to vector<8x64xf32>
    %189 = arith.addf %188, %187 : vector<8x64xf32>
    %190 = arith.divf %188, %189 : vector<8x64xf32>
    %191 = vector.extract_strided_slice %190 {offsets = [0, 0], sizes = [8, 32], strides = [1, 1]} : vector<8x64xf32> to vector<8x32xf32>
    %192 = vector.extract_strided_slice %190 {offsets = [0, 32], sizes = [8, 32], strides = [1, 1]} : vector<8x64xf32> to vector<8x32xf32>
    %193 = vector.extract_strided_slice %181 {offsets = [0, 64], sizes = [8, 32], strides = [1, 1]} : vector<8x128xf32> to vector<8x32xf32>
    %194 = vector.extract_strided_slice %183 {offsets = [0, 64], sizes = [8, 32], strides = [1, 1]} : vector<8x128xf32> to vector<8x32xf32>
    %195 = arith.mulf %191, %194 : vector<8x32xf32>
    %196 = arith.addf %193, %195 : vector<8x32xf32>
    %197 = math.tanh %196 : vector<8x32xf32>
    %cst_45 = arith.constant 1.000000e+00 : f32
    %198 = vector.broadcast %cst_45 : f32 to vector<8x32xf32>
    %199 = arith.subf %198, %192 : vector<8x32xf32>
    %200 = arith.mulf %199, %197 : vector<8x32xf32>
    %201 = arith.mulf %192, %174 : vector<8x32xf32>
    %202 = arith.addf %200, %201 : vector<8x32xf32>
    %203 = vector.extract_strided_slice %8 {offsets = [48, 0], sizes = [8, 32], strides = [1, 1]} : vector<64x32xf32> to vector<8x32xf32>
    %204 = arith.addf %202, %203 : vector<8x32xf32>
    %205 = tpu.concatenate %204, %11 in 1 : vector<8x32xf32>, vector<8x96xf32> -> vector<8x128xf32>
    %c0_46 = arith.constant 0 : index
    %c48 = arith.constant 48 : index
    %c0_47 = arith.constant 0 : index
    %206 = vector.load %arg6[%c0_46, %c48, %c0_47] : memref<1x64x128xf32, #tpu.memory_space<vmem>>, vector<1x8x128xf32>
    %207 = vector.shape_cast %206 : vector<1x8x128xf32> to vector<8x128xf32>
    %208 = vector.shape_cast %205 : vector<8x128xf32> to vector<1x8x128xf32>
    tpu.vector_store %arg6[%c0_46, %c48, %c0_47], %208 {strides = array<i32>} : memref<1x64x128xf32, #tpu.memory_space<vmem>>, vector<1x8x128xf32>,
    %209 = vector.extract_strided_slice %6 {offsets = [56, 0], sizes = [8, 128], strides = [1, 1]} : vector<64x128xf32> to vector<8x128xf32>
    %cst_48 = arith.constant dense<0.000000e+00> : vector<8x128xf32>
    %210 = tpu.matmul %202, %9, %cst_48 {dimension_numbers = #tpu.dot_dimension_numbers<[1], [0], [0], [1], [0, 0, 1, 1], [], []>} : vector<8x32xf32>, vector<32x128xf32>, vector<8x128xf32> -> vector<8x128xf32>
    %211 = arith.addf %210, %10 : vector<8x128xf32>
    %212 = arith.addf %209, %211 : vector<8x128xf32>
    %213 = vector.extract_strided_slice %212 {offsets = [0, 0], sizes = [8, 64], strides = [1, 1]} : vector<8x128xf32> to vector<8x64xf32>
    %214 = arith.negf %213 : vector<8x64xf32>
    %215 = math.exp %214 : vector<8x64xf32>
    %cst_49 = arith.constant 1.000000e+00 : f32
    %216 = vector.broadcast %cst_49 : f32 to vector<8x64xf32>
    %217 = arith.addf %216, %215 : vector<8x64xf32>
    %218 = arith.divf %216, %217 : vector<8x64xf32>
    %219 = vector.extract_strided_slice %218 {offsets = [0, 0], sizes = [8, 32], strides = [1, 1]} : vector<8x64xf32> to vector<8x32xf32>
    %220 = vector.extract_strided_slice %218 {offsets = [0, 32], sizes = [8, 32], strides = [1, 1]} : vector<8x64xf32> to vector<8x32xf32>
    %221 = vector.extract_strided_slice %209 {offsets = [0, 64], sizes = [8, 32], strides = [1, 1]} : vector<8x128xf32> to vector<8x32xf32>
    %222 = vector.extract_strided_slice %211 {offsets = [0, 64], sizes = [8, 32], strides = [1, 1]} : vector<8x128xf32> to vector<8x32xf32>
    %223 = arith.mulf %219, %222 : vector<8x32xf32>
    %224 = arith.addf %221, %223 : vector<8x32xf32>
    %225 = math.tanh %224 : vector<8x32xf32>
    %cst_50 = arith.constant 1.000000e+00 : f32
    %226 = vector.broadcast %cst_50 : f32 to vector<8x32xf32>
    %227 = arith.subf %226, %220 : vector<8x32xf32>
    %228 = arith.mulf %227, %225 : vector<8x32xf32>
    %229 = arith.mulf %220, %202 : vector<8x32xf32>
    %230 = arith.addf %228, %229 : vector<8x32xf32>
    %231 = vector.extract_strided_slice %8 {offsets = [56, 0], sizes = [8, 32], strides = [1, 1]} : vector<64x32xf32> to vector<8x32xf32>
    %232 = arith.addf %230, %231 : vector<8x32xf32>
    %233 = tpu.concatenate %232, %11 in 1 : vector<8x32xf32>, vector<8x96xf32> -> vector<8x128xf32>
    %c0_51 = arith.constant 0 : index
    %c56 = arith.constant 56 : index
    %c0_52 = arith.constant 0 : index
    %234 = vector.load %arg6[%c0_51, %c56, %c0_52] : memref<1x64x128xf32, #tpu.memory_space<vmem>>, vector<1x8x128xf32>
    %235 = vector.shape_cast %234 : vector<1x8x128xf32> to vector<8x128xf32>
    %236 = vector.shape_cast %233 : vector<8x128xf32> to vector<1x8x128xf32>
    tpu.vector_store %arg6[%c0_51, %c56, %c0_52], %236 {strides = array<i32>} : memref<1x64x128xf32, #tpu.memory_space<vmem>>, vector<1x8x128xf32>,
    %237 = tpu.concatenate %230, %11 in 1 : vector<8x32xf32>, vector<8x96xf32> -> vector<8x128xf32>
    %c0_53 = arith.constant 0 : index
    %c0_54 = arith.constant 0 : index
    %c0_55 = arith.constant 0 : index
    %238 = vector.load %arg7[%c0_53, %c0_54, %c0_55] : memref<1x8x128xf32, #tpu.memory_space<vmem>>, vector<1x8x128xf32>
    %239 = vector.shape_cast %238 : vector<1x8x128xf32> to vector<8x128xf32>
    %240 = vector.shape_cast %237 : vector<8x128xf32> to vector<1x8x128xf32>
    tpu.vector_store %arg7[%c0_53, %c0_54, %c0_55], %240 {strides = array<i32>} : memref<1x8x128xf32, #tpu.memory_space<vmem>>, vector<1x8x128xf32>,
    return
  }
  func.func @transform_0(%arg0: i32) -> (i32, i32, i32) {
    %c0_i32 = arith.constant 0 : i32
    %c0_i32_0 = arith.constant 0 : i32
    %c0_i32_1 = arith.constant 0 : i32
    return %arg0, %c0_i32, %c0_i32_0 : i32, i32, i32
  }
  func.func @transform_1(%arg0: i32) -> (i32, i32) {
    %c0_i32 = arith.constant 0 : i32
    %c0_i32_0 = arith.constant 0 : i32
    %c0_i32_1 = arith.constant 0 : i32
    return %c0_i32, %c0_i32_0 : i32, i32
  }
  func.func @transform_2(%arg0: i32) -> (i32, i32) {
    %c0_i32 = arith.constant 0 : i32
    %c0_i32_0 = arith.constant 0 : i32
    %c0_i32_1 = arith.constant 0 : i32
    return %c0_i32, %c0_i32_0 : i32, i32
  }
  func.func @transform_3(%arg0: i32) -> (i32, i32) {
    %c0_i32 = arith.constant 0 : i32
    %c0_i32_0 = arith.constant 0 : i32
    %c0_i32_1 = arith.constant 0 : i32
    return %c0_i32, %c0_i32_0 : i32, i32
  }
  func.func @transform_4(%arg0: i32) -> (i32, i32) {
    %c0_i32 = arith.constant 0 : i32
    %c0_i32_0 = arith.constant 0 : i32
    %c0_i32_1 = arith.constant 0 : i32
    return %c0_i32, %c0_i32_0 : i32, i32
  }
  func.func @transform_5(%arg0: i32) -> (i32, i32, i32) {
    %c0_i32 = arith.constant 0 : i32
    %c0_i32_0 = arith.constant 0 : i32
    %c0_i32_1 = arith.constant 0 : i32
    return %arg0, %c0_i32, %c0_i32_0 : i32, i32, i32
  }
  func.func @transform_6(%arg0: i32) -> (i32, i32, i32) {
    %c0_i32 = arith.constant 0 : i32
    %c0_i32_0 = arith.constant 0 : i32
    %c0_i32_1 = arith.constant 0 : i32
    return %arg0, %c0_i32, %c0_i32_0 : i32, i32, i32
  }
}

</mosaic_0001>

<llo_original>
// kernel: tpu_custom_call.1
$region0: #{tpu_custom_call.1}
  #allocation0 [shape = 'u32[]', space=smem, size = 0x4, offset = 0x4, fixed_abs, tag = 'smem constant byte address 0x4 - core index']
  #allocation1 [shape = 'u32[144,128]{1,0:T(1,128)}', space=vmem, size = 0x12000, scoped, tag = 'internal scratch']
  %s0 = inlined_call_operand.vmem [shape: f32[4,64,16], index: 0, kind: input, shape index: {}]
  %s1 = inlined_call_operand.vmem [shape: f32[16,128], index: 1, kind: input, shape index: {}]
  %s2 = inlined_call_operand.vmem [shape: f32[1,128], index: 2, kind: input, shape index: {}]
  %s3 = inlined_call_operand.vmem [shape: f32[32,128], index: 3, kind: input, shape index: {}]
  %s4 = inlined_call_operand.vmem [shape: f32[8,128], index: 4, kind: input, shape index: {}]
  %s5 = inlined_call_operand.hbm [shape: f32[4,64,128], index: 5, kind: output, shape index: {0}]
  %s6 = inlined_call_operand.hbm [shape: f32[4,8,128], index: 6, kind: output, shape index: {1}]
  %7 = xla_tuple %s5, %s6
  %s8 = sld [smem:[#allocation0]]
  $region61: #{tpu_custom_call.1} parent=0
    _
  %s10 = ssub.s32 1, %s8
  %s11 = scalar_select 0, %s10, %s8
  $region1: #{tpu_custom_call.1} parent=0
    #allocation2 [shape = 'u8[65536]{0}', space=vmem, size = 0x10000, scoped, tag = 'output window, operand 0']
    #allocation3 [shape = 's32[2]{0}', space=sflag, size = 0x8, scoped, tag = 'scoped memory for tpu_custom_call.1']
    #allocation4 [shape = 'u8[8192]{0}', space=vmem, size = 0x2000, scoped, tag = 'output window, operand 1']
    #allocation5 [shape = 's32[2]{0}', space=sflag, size = 0x8, scoped, tag = 'scoped memory for tpu_custom_call.1']
    %12 = vsyncpa [#allocation3], 0
    %s13 = scalar_lea.sflag [#allocation3], 1
    %14 = vsyncpa %s13, 0
    %15 = vsyncpa [#allocation5], 0
    %s16 = scalar_lea.sflag [#allocation5], 1
    %17 = vsyncpa %s16, 0
    loop: start=0, step=1, limit=6
    $region2: #{tpu_custom_call.1} parent=1 // loop_pre_header
      _
    $region3: #{tpu_custom_call.1} parent=1 // loop_header
      %s19 = sphi 0, %s23
      %p20 = scmp.ge.s32.totalorder %s19, 6
      %s29 = sphi 0, %s31
      %s32 = sphi 0, %s29
      %s33 = sphi 0, %s32
      %s49 = sphi 0, %s33
      %s53 = sphi 0, %s53
      %s55 = sphi 0, %s53
      %s56 = sphi 0, %s55
      %s70 = sphi 0, %s56
      %s74 = sphi 0, %s74
      %s76 = sphi 0, %s74
      %s77 = sphi 0, %s76
      %s91 = sphi 0, %s77
      %s95 = sphi 0, %s95
      %s97 = sphi 0, %s95
      %s98 = sphi 0, %s97
      %s112 = sphi 0, %s98
      %s116 = sphi 0, %s116
      %s118 = sphi 0, %s116
      %s119 = sphi 0, %s118
      %s133 = sphi 0, %s119
      %s139 = sphi 0, %s141
      %s142 = sphi 0, %s139
      %s143 = sphi 0, %s142
      %s159 = sphi 0, %s143
      %s165 = sphi 0, %s167
      %s168 = sphi 0, %s165
      %s169 = sphi 0, %s168
      %s185 = sphi 0, %s169
    $region4: #{tpu_custom_call.1} parent=1 // loop_header_branch
      %22 = sbr.rel (%p20) target = $region8
    $region5: #{tpu_custom_call.1} parent=1 // loop_body
      %s24 = ssub.s32 %s19, 1
      %s25 = ssub.s32 %s19, 2
      %s26 = sadd.s32 %s19, 1
      %s27 = ssub.s32 %s19, %s26
      %p28 = scmp.eq.s32.totalorder %s27, 0
      %s30 = sadd.s32 %s29, 1
      %s31 = scalar_select %p28, %s29, %s30
      %p34 = pneg %p28
      %p35 = scmp.eq.s32.totalorder %s19, 3
      %p36 = por %p34, %p35
      %p37 = scmp.ne.s32.totalorder %s29, %s32
      %p38 = scmp.eq.s32.totalorder %s19, 0
      %p39 = por %p37, %p38
      %p40 = scmp.ne.s32.totalorder %s29, %s32
      %p41 = scmp.eq.s32.totalorder %s24, 3
      %p42 = por %p40, %p41
      %p43 = scmp.ne.s32.totalorder %s32, %s33
      %p44 = scmp.eq.s32.totalorder %s24, 0
      %p45 = por %p43, %p44
      %p46 = scmp.ne.s32.totalorder %s32, %s33
      %p47 = scmp.eq.s32.totalorder %s25, 3
      %p48 = por %p46, %p47
      %p50 = scmp.ne.s32.totalorder %s33, %s49
      %p51 = scmp.eq.s32.totalorder %s25, 0
      %p52 = por %p50, %p51
      %s54 = sadd.s32 %s53, 1
      %p57 = scmp.eq.s32.totalorder %s19, 3
      %p58 = scmp.ne.s32.totalorder %s53, %s55
      %p59 = scmp.eq.s32.totalorder %s19, 0
      %p60 = por %p58, %p59
      %p61 = scmp.ne.s32.totalorder %s53, %s55
      %p62 = scmp.eq.s32.totalorder %s24, 3
      %p63 = por %p61, %p62
      %p64 = scmp.ne.s32.totalorder %s55, %s56
      %p65 = scmp.eq.s32.totalorder %s24, 0
      %p66 = por %p64, %p65
      %p67 = scmp.ne.s32.totalorder %s55, %s56
      %p68 = scmp.eq.s32.totalorder %s25, 3
      %p69 = por %p67, %p68
      %p71 = scmp.ne.s32.totalorder %s56, %s70
      %p72 = scmp.eq.s32.totalorder %s25, 0
      %p73 = por %p71, %p72
      %s75 = sadd.s32 %s74, 1
      %p78 = scmp.eq.s32.totalorder %s19, 3
      %p79 = scmp.ne.s32.totalorder %s74, %s76
      %p80 = scmp.eq.s32.totalorder %s19, 0
      %p81 = por %p79, %p80
      %p82 = scmp.ne.s32.totalorder %s74, %s76
      %p83 = scmp.eq.s32.totalorder %s24, 3
      %p84 = por %p82, %p83
      %p85 = scmp.ne.s32.totalorder %s76, %s77
      %p86 = scmp.eq.s32.totalorder %s24, 0
      %p87 = por %p85, %p86
      %p88 = scmp.ne.s32.totalorder %s76, %s77
      %p89 = scmp.eq.s32.totalorder %s25, 3
      %p90 = por %p88, %p89
      %p92 = scmp.ne.s32.totalorder %s77, %s91
      %p93 = scmp.eq.s32.totalorder %s25, 0
      %p94 = por %p92, %p93
      %s96 = sadd.s32 %s95, 1
      %p99 = scmp.eq.s32.totalorder %s19, 3
      %p100 = scmp.ne.s32.totalorder %s95, %s97
      %p101 = scmp.eq.s32.totalorder %s19, 0
      %p102 = por %p100, %p101
      %p103 = scmp.ne.s32.totalorder %s95, %s97
      %p104 = scmp.eq.s32.totalorder %s24, 3
      %p105 = por %p103, %p104
      %p106 = scmp.ne.s32.totalorder %s97, %s98
      %p107 = scmp.eq.s32.totalorder %s24, 0
      %p108 = por %p106, %p107
      %p109 = scmp.ne.s32.totalorder %s97, %s98
      %p110 = scmp.eq.s32.totalorder %s25, 3
      %p111 = por %p109, %p110
      %p113 = scmp.ne.s32.totalorder %s98, %s112
      %p114 = scmp.eq.s32.totalorder %s25, 0
      %p115 = por %p113, %p114
      %s117 = sadd.s32 %s116, 1
      %p120 = scmp.eq.s32.totalorder %s19, 3
      %p121 = scmp.ne.s32.totalorder %s116, %s118
      %p122 = scmp.eq.s32.totalorder %s19, 0
      %p123 = por %p121, %p122
      %p124 = scmp.ne.s32.totalorder %s116, %s118
      %p125 = scmp.eq.s32.totalorder %s24, 3
      %p126 = por %p124, %p125
      %p127 = scmp.ne.s32.totalorder %s118, %s119
      %p128 = scmp.eq.s32.totalorder %s24, 0
      %p129 = por %p127, %p128
      %p130 = scmp.ne.s32.totalorder %s118, %s119
      %p131 = scmp.eq.s32.totalorder %s25, 3
      %p132 = por %p130, %p131
      %p134 = scmp.ne.s32.totalorder %s119, %s133
      %p135 = scmp.eq.s32.totalorder %s25, 0
      %p136 = por %p134, %p135
      %s137 = ssub.s32 %s19, %s26
      %p138 = scmp.eq.s32.totalorder %s137, 0
      %s140 = sadd.s32 %s139, 1
      %s141 = scalar_select %p138, %s139, %s140
      %p144 = pneg %p138
      %p145 = scmp.eq.s32.totalorder %s19, 3
      %p146 = por %p144, %p145
      %p147 = scmp.ne.s32.totalorder %s139, %s142
      %p148 = scmp.eq.s32.totalorder %s19, 0
      %p149 = por %p147, %p148
      %p150 = scmp.ne.s32.totalorder %s139, %s142
      %p151 = scmp.eq.s32.totalorder %s24, 3
      %p152 = por %p150, %p151
      %p153 = scmp.ne.s32.totalorder %s142, %s143
      %p154 = scmp.eq.s32.totalorder %s24, 0
      %p155 = por %p153, %p154
      %p156 = scmp.ne.s32.totalorder %s142, %s143
      %p157 = scmp.eq.s32.totalorder %s25, 3
      %p158 = por %p156, %p157
      %p160 = scmp.ne.s32.totalorder %s143, %s159
      %p161 = scmp.eq.s32.totalorder %s25, 0
      %p162 = por %p160, %p161
      %s163 = ssub.s32 %s19, %s26
      %p164 = scmp.eq.s32.totalorder %s163, 0
      %s166 = sadd.s32 %s165, 1
      %s167 = scalar_select %p164, %s165, %s166
      %p170 = pneg %p164
      %p171 = scmp.eq.s32.totalorder %s19, 3
      %p172 = por %p170, %p171
      %p173 = scmp.ne.s32.totalorder %s165, %s168
      %p174 = scmp.eq.s32.totalorder %s19, 0
      %p175 = por %p173, %p174
      %p176 = scmp.ne.s32.totalorder %s165, %s168
      %p177 = scmp.eq.s32.totalorder %s24, 3
      %p178 = por %p176, %p177
      %p179 = scmp.ne.s32.totalorder %s168, %s169
      %p180 = scmp.eq.s32.totalorder %s24, 0
      %p181 = por %p179, %p180
      %p182 = scmp.ne.s32.totalorder %s168, %s169
      %p183 = scmp.eq.s32.totalorder %s25, 3
      %p184 = por %p182, %p183
      %p186 = scmp.ne.s32.totalorder %s169, %s185
      %p187 = scmp.eq.s32.totalorder %s25, 0
      %p188 = por %p186, %p187
      %p189 = scmp.le.s32.totalorder 1, %s19
      %p190 = scmp.lt.s32.totalorder %s19, 5
      %p191 = pnand %p189, %p190
      %p192 = pneg %p191
      // Predicated region
      $region9: #{tpu_custom_call.1} parent=5 // pred_check
        _
      $region10: #{tpu_custom_call.1} parent=5 // pred_check_branch
        %194 = sbr.rel (%p191) target = $region12
      $region11: #{tpu_custom_call.1} parent=5 // pred_region
        %s195 = ssub.s32 %s19, 1
        // Predicated region
        $region13: #{tpu_custom_call.1} parent=11 // pred_check
          %p196 = pneg %p66
        $region14: #{tpu_custom_call.1} parent=11 // pred_check_branch
          %198 = sbr.rel (%p196) target = $region16
        $region15: #{tpu_custom_call.1} parent=11 // pred_region
          _
        $region16: #{tpu_custom_call.1} parent=11 // pred_fallthru
          _
        // Predicated region
        $region17: #{tpu_custom_call.1} parent=11 // pred_check
          %p199 = pneg %p87
        $region18: #{tpu_custom_call.1} parent=11 // pred_check_branch
          %201 = sbr.rel (%p199) target = $region20
        $region19: #{tpu_custom_call.1} parent=11 // pred_region
          _
        $region20: #{tpu_custom_call.1} parent=11 // pred_fallthru
          _
        // Predicated region
        $region21: #{tpu_custom_call.1} parent=11 // pred_check
          %p202 = pneg %p108
        $region22: #{tpu_custom_call.1} parent=11 // pred_check_branch
          %204 = sbr.rel (%p202) target = $region24
        $region23: #{tpu_custom_call.1} parent=11 // pred_region
          _
        $region24: #{tpu_custom_call.1} parent=11 // pred_fallthru
          _
        // Predicated region
        $region25: #{tpu_custom_call.1} parent=11 // pred_check
          %p205 = pneg %p129
        $region26: #{tpu_custom_call.1} parent=11 // pred_check_branch
          %207 = sbr.rel (%p205) target = $region28
        $region27: #{tpu_custom_call.1} parent=11 // pred_region
          _
        $region28: #{tpu_custom_call.1} parent=11 // pred_fallthru
          _
      $region12: #{tpu_custom_call.1} parent=5 // pred_fallthru
        _
      %p208 = scmp.lt.s32.totalorder %s19, 4
      // Predicated region
      $region29: #{tpu_custom_call.1} parent=5 // pred_check
        %p209 = pneg %p208
      $region30: #{tpu_custom_call.1} parent=5 // pred_check_branch
        %211 = sbr.rel (%p209) target = $region32
      $region31: #{tpu_custom_call.1} parent=5 // pred_region
        // Predicated region
        $region33: #{tpu_custom_call.1} parent=31 // pred_check
          %p212 = pneg %p39
        $region34: #{tpu_custom_call.1} parent=31 // pred_check_branch
          %214 = sbr.rel (%p212) target = $region36
        $region35: #{tpu_custom_call.1} parent=31 // pred_region
          %p215 = scmp.lt.s32.totalorder %s19, 3
          %s216 = scalar_select %p215, %s19, 3
          %s217 = smul.addr %s216, 8
          %s218 = smul.addr %s217, 8
          %s219 = scalar_lea.vmem %s0, %s218
        $region36: #{tpu_custom_call.1} parent=31 // pred_fallthru
          _
      $region32: #{tpu_custom_call.1} parent=5 // pred_fallthru
        _
      %p220 = scmp.le.s32.totalorder 1, %s19
      %p221 = scmp.lt.s32.totalorder %s19, 5
      %p222 = pnand %p220, %p221
      %p223 = pneg %p222
      // Predicated region
      $region37: #{tpu_custom_call.1} parent=5 // pred_check
        _
      $region38: #{tpu_custom_call.1} parent=5 // pred_check_branch
        %225 = sbr.rel (%p222) target = $region40
      $region39: #{tpu_custom_call.1} parent=5 // pred_region
        %s226 = ssub.s32 %s19, 1
        %p227 = scmp.lt.s32.totalorder %s24, 3
        %s228 = scalar_select %p227, %s24, 3
        %s229 = smul.addr %s228, 8
        %s230 = smul.addr %s229, 8
        %s231 = scalar_lea.vmem %s0, %s230
        %p232 = pneg %p45
        %p233 = pneg %p42
        %p234 = pneg %p66
        %p235 = pneg %p63
        %p236 = pneg %p87
        %p237 = pneg %p84
        %p238 = pneg %p108
        %p239 = pneg %p105
        %p240 = pneg %p129
        %p241 = pneg %p126
        %p242 = pneg %p155
        %p243 = pneg %p152
        %s244 = sand.u32 %s142, 1
        %s245 = scalar_lea.sflag [#allocation3], %s244
        %s246 = sand.u32 %s142, 1
        %s247 = smul.addr %s246, 64
        %s248 = scalar_lea.vmem [#allocation2], %s247
        %p249 = pneg %p181
        %p250 = pneg %p178
        %s251 = sand.u32 %s168, 1
        %s252 = scalar_lea.sflag [#allocation5], %s251
        %s253 = sand.u32 %s168, 1
        %s254 = smul.addr %s253, 8
        %s255 = scalar_lea.vmem [#allocation4], %s254
        %p256 = scmp.lt.s32.totalorder %s24, 3
        %s257 = scalar_select %p256, %s24, 3
        %s258 = smul.addr %s257, 8
        %s259 = smul.addr %s258, 8
        %s260 = scalar_lea.vmem %s0, %s259
        %v261 = vld [vmem:[%s260] sm:$0xff]
        %v262 = vld [vmem:[%s260 + $0x8] sm:$0xff]
        %v263 = vld [vmem:[%s260 + $0x10] sm:$0xff]
        %v264 = vld [vmem:[%s260 + $0x18] sm:$0xff]
        %v265 = vld [vmem:[%s260 + $0x20] sm:$0xff]
        %v266 = vld [vmem:[%s260 + $0x28] sm:$0xff]
        %v267 = vld [vmem:[%s260 + $0x30] sm:$0xff]
        %v268 = vld [vmem:[%s260 + $0x38] sm:$0xff]
        %v269 = vld [vmem:[%s1] sm:$0xff]
        %v270 = vld [vmem:[%s1 + $0x8] sm:$0xff]
        %v271 = vld [vmem:[%s2] sm:$0x1]
        %v273 = vlaneseq
        %v274 = vshrl.u32 %v273, 7
        %v275 = vsub.s32 0, %v274
        %v276 = vrot.slane %v271, %v275
        %vm278 = vcmask 130048
        %v280 = vsel %vm278, %v261, 0
        %v283 = vsel %vm278, %v262, 0
        %v286 = vsel %vm278, %v263, 0
        %v289 = vsel %vm278, %v264, 0
        %v292 = vsel %vm278, %v265, 0
        %v295 = vsel %vm278, %v266, 0
        %v298 = vsel %vm278, %v267, 0
        %v301 = vsel %vm278, %v268, 0
        %303 = vmatprep.subr.mxu0 0.0
        %304 = vmatpush1.msra.mxu0 %v269
        %305 = vmatprep.subr.mxu0 0.0
        %306 = vmatpush1.msra.mxu0 %v270
        %307 = vmatprep.subr.mxu0 0.0
        %308 = vmatpush1.msra.mxu0 0.0
        %309 = vmatprep.subr.mxu0 0.0
        %310 = vmatpush1.msra.mxu0 0.0
        %311 = vmatprep.subr.mxu0 0.0
        %312 = vmatpush1.msra.mxu0 0.0
        %313 = vmatprep.subr.mxu0 0.0
        %314 = vmatpush1.msra.mxu0 0.0
        %315 = vmatprep.subr.mxu0 0.0
        %316 = vmatpush1.msra.mxu0 0.0
        %317 = vmatprep.subr.mxu0 0.0
        %318 = vmatpush1.msra.mxu0 0.0
        %319 = vmatprep.subr.mxu0 0.0
        %320 = vmatpush1.msra.mxu0 0.0
        %321 = vmatprep.subr.mxu0 0.0
        %322 = vmatpush1.msra.mxu0 0.0
        %323 = vmatprep.subr.mxu0 0.0
        %324 = vmatpush1.msra.mxu0 0.0
        %325 = vmatprep.subr.mxu0 0.0
        %326 = vmatpush1.msra.mxu0 0.0
        %327 = vmatprep.subr.mxu0 0.0
        %328 = vmatpush1.msra.mxu0 0.0
        %329 = vmatprep.subr.mxu0 0.0
        %330 = vmatpush1.msra.mxu0 0.0
        %331 = vmatprep.subr.mxu0 0.0
        %332 = vmatpush1.msra.mxu0 0.0
        %333 = vmatprep.subr.mxu0 0.0
        %334 = vmatpush1.msra.mxu0 0.0
        %335 = vmatprep.subr.mxu0 0.0
        %336 = vmatpush1.msra.mxu0 0.0
        %337 = vmatprep.subr.mxu0 0.0
        %338 = vmatpush1.msra.mxu0 0.0
        %339 = vmatprep.subr.mxu0 0.0
        %340 = vmatpush1.msra.mxu0 0.0
        %341 = vmatprep.subr.mxu0 0.0
        %342 = vmatpush1.msra.mxu0 0.0
        %343 = vmatprep.subr.mxu0 0.0
        %344 = vmatpush1.msra.mxu0 0.0
        %345 = vmatprep.subr.mxu0 0.0
        %346 = vmatpush1.msra.mxu0 0.0
        %347 = vmatprep.subr.mxu0 0.0
        %348 = vmatpush1.msra.mxu0 0.0
        %349 = vmatprep.subr.mxu0 0.0
        %350 = vmatpush1.msra.mxu0 0.0
        %351 = vmatprep.subr.mxu0 0.0
        %352 = vmatpush1.msra.mxu0 0.0
        %353 = vmatprep.subr.mxu0 0.0
        %354 = vmatpush1.msra.mxu0 0.0
        %355 = vmatprep.subr.mxu0 0.0
        %356 = vmatpush1.msra.mxu0 0.0
        %357 = vmatprep.subr.mxu0 0.0
        %358 = vmatpush1.msra.mxu0 0.0
        %359 = vmatprep.subr.mxu0 0.0
        %360 = vmatpush1.msra.mxu0 0.0
        %361 = vmatprep.subr.mxu0 0.0
        %362 = vmatpush1.msra.mxu0 0.0
        %363 = vmatprep.subr.mxu0 0.0
        %364 = vmatpush1.msra.mxu0 0.0
        %365 = vmatprep.subr.mxu0 0.0
        %366 = vmatpush1.msra.mxu0 0.0
        %367 = vmatprep.mubr.f32.mxu0 0.0
        %368 = vmatmul.mubr.f32.gmra.mrb[0].mxu0 %v280
        %v369 = vpop.f32.mrb[0].mxu0
        %v370 = vadd.f32 %v276, %v369
        %v371 = vpop.f32.mrb[0].mxu0
        %372 = vmatprep.mubr.f32.mxu0 0.0
        %373 = vmatmul.mubr.f32.gmra.mrb[0].mxu0 %v283
        %v374 = vpop.f32.mrb[0].mxu0
        %v375 = vadd.f32 %v276, %v374
        %v376 = vpop.f32.mrb[0].mxu0
        %377 = vmatprep.mubr.f32.mxu0 0.0
        %378 = vmatmul.mubr.f32.gmra.mrb[0].mxu0 %v286
        %v379 = vpop.f32.mrb[0].mxu0
        %v380 = vadd.f32 %v276, %v379
        %v381 = vpop.f32.mrb[0].mxu0
        %382 = vmatprep.mubr.f32.mxu0 0.0
        %383 = vmatmul.mubr.f32.gmra.mrb[0].mxu0 %v289
        %v384 = vpop.f32.mrb[0].mxu0
        %v385 = vadd.f32 %v276, %v384
        %v386 = vpop.f32.mrb[0].mxu0
        %387 = vmatprep.mubr.f32.mxu0 0.0
        %388 = vmatmul.mubr.f32.gmra.mrb[0].mxu0 %v292
        %v389 = vpop.f32.mrb[0].mxu0
        %v390 = vadd.f32 %v276, %v389
        %v391 = vpop.f32.mrb[0].mxu0
        %392 = vmatprep.mubr.f32.mxu0 0.0
        %393 = vmatmul.mubr.f32.gmra.mrb[0].mxu0 %v295
        %v394 = vpop.f32.mrb[0].mxu0
        %v395 = vadd.f32 %v276, %v394
        %v396 = vpop.f32.mrb[0].mxu0
        %397 = vmatprep.mubr.f32.mxu0 0.0
        %398 = vmatmul.mubr.f32.gmra.mrb[0].mxu0 %v298
        %v399 = vpop.f32.mrb[0].mxu0
        %v400 = vadd.f32 %v276, %v399
        %v401 = vpop.f32.mrb[0].mxu0
        %402 = vmatprep.mubr.f32.mxu0 0.0
        %403 = vmatmul.mubr.f32.gmra.mrb[0].mxu0 %v301
        %v404 = vpop.f32.mrb[0].mxu0
        %v405 = vadd.f32 %v276, %v404
        %v406 = vpop.f32.mrb[0].mxu0
        %407 = vdwg.mxu0
        %v408 = vtanh.pop %v370
        %v409 = vtanh.pop %v375
        %v410 = vtanh.pop %v380
        %v411 = vtanh.pop %v385
        %v412 = vtanh.pop %v390
        %v413 = vtanh.pop %v395
        %v414 = vtanh.pop %v400
        %v415 = vtanh.pop %v405
        %v416 = vld [vmem:[%s3] sm:$0xff]
        %v417 = vld [vmem:[%s3 + $0x8] sm:$0xff]
        %v418 = vld [vmem:[%s3 + $0x10] sm:$0xff]
        %v419 = vld [vmem:[%s3 + $0x18] sm:$0xff]
        %v420 = vld [vmem:[%s4] sm:$0xff]
        %vm421 = vcmask 261120
        %v423 = vsel %vm421, 0.0, 0
        %425 = vmatprep.subr.mxu0 0.0
        %426 = vmatpush1.msra.mxu0 %v416
        %427 = vmatprep.subr.mxu0 0.0
        %428 = vmatpush1.msra.mxu0 %v417
        %429 = vmatprep.subr.mxu0 0.0
        %430 = vmatpush1.msra.mxu0 %v418
        %431 = vmatprep.subr.mxu0 0.0
        %432 = vmatpush1.msra.mxu0 %v419
        %433 = vmatprep.subr.mxu0 0.0
        %434 = vmatpush1.msra.mxu0 0.0
        %435 = vmatprep.subr.mxu0 0.0
        %436 = vmatpush1.msra.mxu0 0.0
        %437 = vmatprep.subr.mxu0 0.0
        %438 = vmatpush1.msra.mxu0 0.0
        %439 = vmatprep.subr.mxu0 0.0
        %440 = vmatpush1.msra.mxu0 0.0
        %441 = vmatprep.subr.mxu0 0.0
        %442 = vmatpush1.msra.mxu0 0.0
        %443 = vmatprep.subr.mxu0 0.0
        %444 = vmatpush1.msra.mxu0 0.0
        %445 = vmatprep.subr.mxu0 0.0
        %446 = vmatpush1.msra.mxu0 0.0
        %447 = vmatprep.subr.mxu0 0.0
        %448 = vmatpush1.msra.mxu0 0.0
        %449 = vmatprep.subr.mxu0 0.0
        %450 = vmatpush1.msra.mxu0 0.0
        %451 = vmatprep.subr.mxu0 0.0
        %452 = vmatpush1.msra.mxu0 0.0
        %453 = vmatprep.subr.mxu0 0.0
        %454 = vmatpush1.msra.mxu0 0.0
        %455 = vmatprep.subr.mxu0 0.0
        %456 = vmatpush1.msra.mxu0 0.0
        %457 = vmatprep.subr.mxu0 0.0
        %458 = vmatpush1.msra.mxu0 0.0
        %459 = vmatprep.subr.mxu0 0.0
        %460 = vmatpush1.msra.mxu0 0.0
        %461 = vmatprep.subr.mxu0 0.0
        %462 = vmatpush1.msra.mxu0 0.0
        %463 = vmatprep.subr.mxu0 0.0
        %464 = vmatpush1.msra.mxu0 0.0
        %465 = vmatprep.subr.mxu0 0.0
        %466 = vmatpush1.msra.mxu0 0.0
        %467 = vmatprep.subr.mxu0 0.0
        %468 = vmatpush1.msra.mxu0 0.0
        %469 = vmatprep.subr.mxu0 0.0
        %470 = vmatpush1.msra.mxu0 0.0
        %471 = vmatprep.subr.mxu0 0.0
        %472 = vmatpush1.msra.mxu0 0.0
        %473 = vmatprep.subr.mxu0 0.0
        %474 = vmatpush1.msra.mxu0 0.0
        %475 = vmatprep.subr.mxu0 0.0
        %476 = vmatpush1.msra.mxu0 0.0
        %477 = vmatprep.subr.mxu0 0.0
        %478 = vmatpush1.msra.mxu0 0.0
        %479 = vmatprep.subr.mxu0 0.0
        %480 = vmatpush1.msra.mxu0 0.0
        %481 = vmatprep.subr.mxu0 0.0
        %482 = vmatpush1.msra.mxu0 0.0
        %483 = vmatprep.subr.mxu0 0.0
        %484 = vmatpush1.msra.mxu0 0.0
        %485 = vmatprep.subr.mxu0 0.0
        %486 = vmatpush1.msra.mxu0 0.0
        %487 = vmatprep.subr.mxu0 0.0
        %488 = vmatpush1.msra.mxu0 0.0
        %489 = vmatprep.mubr.f32.mxu0 0.0
        %490 = vmatmul.mubr.f32.gmra.mrb[0].mxu0 %v423
        %v491 = vpop.f32.mrb[0].mxu0
        %v492 = vadd.f32 %v420, %v491
        %v493 = vpop.f32.mrb[0].mxu0
        %494 = vdwg.mxu0
        %v495 = vadd.f32 %v370, %v492
        %v496 = vxor.u32 %v495, 2147483648
        %v497 = vmul.f32 %v496, 1.442695
        %v498 = vpow.pop %v497
        %v499 = vadd.f32 %v498, 1.0
        %v500 = vrcp.pop %v499
        %v501 = vmul.f32 1.0, %v500
        %503 = vrot.lane.b32.xlu0 %v492, 64
        %v504 = vpop.permute.xlu0 %503
        %v506 = vmul.f32 %v501, %v504
        %508 = vrot.lane.b32.xlu0 %v506, 64
        %v509 = vpop.permute.xlu0 %508
        %v511 = vadd.f32 %v370, %v509
        %v512 = vtanh.pop %v511
        %v513 = vsub.f32 1.0, %v501
        %515 = vrot.lane.b32.xlu0 %v512, 96
        %v516 = vpop.permute.xlu0 %515
        %v518 = vmul.f32 %v513, %v516
        %v519 = vmul.f32 %v501, 0.0
        %v520 = vadd.f32 %v518, %v519
        %522 = vrot.lane.b32.xlu0 %v408, 64
        %v523 = vpop.permute.xlu0 %522
        %v525 = vadd.f32 %v520, %v523
        %527 = vrot.lane.b32.xlu0 %v525, 96
        %v528 = vpop.permute.xlu0 %527
        %v530 = vsel %vm421, %v528, 0.0
        %531 = vst [vmem:[%s248] sm:$0xff] %v530
        %533 = vrot.lane.b32.xlu0 %v520, 96
        %v534 = vpop.permute.xlu0 %533
        %v535 = vsel %vm421, %v534, 0
        %537 = vmatprep.subr.mxu0 0.0
        %538 = vmatpush1.msra.mxu0 %v416
        %539 = vmatprep.subr.mxu0 0.0
        %540 = vmatpush1.msra.mxu0 %v417
        %541 = vmatprep.subr.mxu0 0.0
        %542 = vmatpush1.msra.mxu0 %v418
        %543 = vmatprep.subr.mxu0 0.0
        %544 = vmatpush1.msra.mxu0 %v419
        %545 = vmatprep.subr.mxu0 0.0
        %546 = vmatpush1.msra.mxu0 0.0
        %547 = vmatprep.subr.mxu0 0.0
        %548 = vmatpush1.msra.mxu0 0.0
        %549 = vmatprep.subr.mxu0 0.0
        %550 = vmatpush1.msra.mxu0 0.0
        %551 = vmatprep.subr.mxu0 0.0
        %552 = vmatpush1.msra.mxu0 0.0
        %553 = vmatprep.subr.mxu0 0.0
        %554 = vmatpush1.msra.mxu0 0.0
        %555 = vmatprep.subr.mxu0 0.0
        %556 = vmatpush1.msra.mxu0 0.0
        %557 = vmatprep.subr.mxu0 0.0
        %558 = vmatpush1.msra.mxu0 0.0
        %559 = vmatprep.subr.mxu0 0.0
        %560 = vmatpush1.msra.mxu0 0.0
        %561 = vmatprep.subr.mxu0 0.0
        %562 = vmatpush1.msra.mxu0 0.0
        %563 = vmatprep.subr.mxu0 0.0
        %564 = vmatpush1.msra.mxu0 0.0
        %565 = vmatprep.subr.mxu0 0.0
        %566 = vmatpush1.msra.mxu0 0.0
        %567 = vmatprep.subr.mxu0 0.0
        %568 = vmatpush1.msra.mxu0 0.0
        %569 = vmatprep.subr.mxu0 0.0
        %570 = vmatpush1.msra.mxu0 0.0
        %571 = vmatprep.subr.mxu0 0.0
        %572 = vmatpush1.msra.mxu0 0.0
        %573 = vmatprep.subr.mxu0 0.0
        %574 = vmatpush1.msra.mxu0 0.0
        %575 = vmatprep.subr.mxu0 0.0
        %576 = vmatpush1.msra.mxu0 0.0
        %577 = vmatprep.subr.mxu0 0.0
        %578 = vmatpush1.msra.mxu0 0.0
        %579 = vmatprep.subr.mxu0 0.0
        %580 = vmatpush1.msra.mxu0 0.0
        %581 = vmatprep.subr.mxu0 0.0
        %582 = vmatpush1.msra.mxu0 0.0
        %583 = vmatprep.subr.mxu0 0.0
        %584 = vmatpush1.msra.mxu0 0.0
        %585 = vmatprep.subr.mxu0 0.0
        %586 = vmatpush1.msra.mxu0 0.0
        %587 = vmatprep.subr.mxu0 0.0
        %588 = vmatpush1.msra.mxu0 0.0
        %589 = vmatprep.subr.mxu0 0.0
        %590 = vmatpush1.msra.mxu0 0.0
        %591 = vmatprep.subr.mxu0 0.0
        %592 = vmatpush1.msra.mxu0 0.0
        %593 = vmatprep.subr.mxu0 0.0
        %594 = vmatpush1.msra.mxu0 0.0
        %595 = vmatprep.subr.mxu0 0.0
        %596 = vmatpush1.msra.mxu0 0.0
        %597 = vmatprep.subr.mxu0 0.0
        %598 = vmatpush1.msra.mxu0 0.0
        %599 = vmatprep.subr.mxu0 0.0
        %600 = vmatpush1.msra.mxu0 0.0
        %601 = vmatprep.mubr.f32.mxu0 0.0
        %602 = vmatmul.mubr.f32.gmra.mrb[0].mxu0 %v535
        %v603 = vpop.f32.mrb[0].mxu0
        %v604 = vadd.f32 %v420, %v603
        %v605 = vpop.f32.mrb[0].mxu0
        %606 = vdwg.mxu0
        %v607 = vadd.f32 %v375, %v604
        %v608 = vxor.u32 %v607, 2147483648
        %v609 = vmul.f32 %v608, 1.442695
        %v610 = vpow.pop %v609
        %v611 = vadd.f32 %v610, 1.0
        %v612 = vrcp.pop %v611
        %v613 = vmul.f32 1.0, %v612
        %615 = vrot.lane.b32.xlu0 %v604, 64
        %v616 = vpop.permute.xlu0 %615
        %v618 = vmul.f32 %v613, %v616
        %620 = vrot.lane.b32.xlu0 %v618, 64
        %v621 = vpop.permute.xlu0 %620
        %v623 = vadd.f32 %v375, %v621
        %v624 = vtanh.pop %v623
        %v625 = vsub.f32 1.0, %v613
        %627 = vrot.lane.b32.xlu0 %v624, 96
        %v628 = vpop.permute.xlu0 %627
        %v630 = vmul.f32 %v625, %v628
        %v631 = vmul.f32 %v613, %v520
        %v632 = vadd.f32 %v630, %v631
        %634 = vrot.lane.b32.xlu0 %v409, 64
        %v635 = vpop.permute.xlu0 %634
        %v637 = vadd.f32 %v632, %v635
        %639 = vrot.lane.b32.xlu0 %v637, 96
        %v640 = vpop.permute.xlu0 %639
        %v642 = vsel %vm421, %v640, 0.0
        %643 = vst [vmem:[%s248 + $0x8] sm:$0xff] %v642
        %645 = vrot.lane.b32.xlu0 %v632, 96
        %v646 = vpop.permute.xlu0 %645
        %v647 = vsel %vm421, %v646, 0
        %649 = vmatprep.subr.mxu0 0.0
        %650 = vmatpush1.msra.mxu0 %v416
        %651 = vmatprep.subr.mxu0 0.0
        %652 = vmatpush1.msra.mxu0 %v417
        %653 = vmatprep.subr.mxu0 0.0
        %654 = vmatpush1.msra.mxu0 %v418
        %655 = vmatprep.subr.mxu0 0.0
        %656 = vmatpush1.msra.mxu0 %v419
        %657 = vmatprep.subr.mxu0 0.0
        %658 = vmatpush1.msra.mxu0 0.0
        %659 = vmatprep.subr.mxu0 0.0
        %660 = vmatpush1.msra.mxu0 0.0
        %661 = vmatprep.subr.mxu0 0.0
        %662 = vmatpush1.msra.mxu0 0.0
        %663 = vmatprep.subr.mxu0 0.0
        %664 = vmatpush1.msra.mxu0 0.0
        %665 = vmatprep.subr.mxu0 0.0
        %666 = vmatpush1.msra.mxu0 0.0
        %667 = vmatprep.subr.mxu0 0.0
        %668 = vmatpush1.msra.mxu0 0.0
        %669 = vmatprep.subr.mxu0 0.0
        %670 = vmatpush1.msra.mxu0 0.0
        %671 = vmatprep.subr.mxu0 0.0
        %672 = vmatpush1.msra.mxu0 0.0
        %673 = vmatprep.subr.mxu0 0.0
        %674 = vmatpush1.msra.mxu0 0.0
        %675 = vmatprep.subr.mxu0 0.0
        %676 = vmatpush1.msra.mxu0 0.0
        %677 = vmatprep.subr.mxu0 0.0
        %678 = vmatpush1.msra.mxu0 0.0
        %679 = vmatprep.subr.mxu0 0.0
        %680 = vmatpush1.msra.mxu0 0.0
        %681 = vmatprep.subr.mxu0 0.0
        %682 = vmatpush1.msra.mxu0 0.0
        %683 = vmatprep.subr.mxu0 0.0
        %684 = vmatpush1.msra.mxu0 0.0
        %685 = vmatprep.subr.mxu0 0.0
        %686 = vmatpush1.msra.mxu0 0.0
        %687 = vmatprep.subr.mxu0 0.0
        %688 = vmatpush1.msra.mxu0 0.0
        %689 = vmatprep.subr.mxu0 0.0
        %690 = vmatpush1.msra.mxu0 0.0
        %691 = vmatprep.subr.mxu0 0.0
        %692 = vmatpush1.msra.mxu0 0.0
        %693 = vmatprep.subr.mxu0 0.0
        %694 = vmatpush1.msra.mxu0 0.0
        %695 = vmatprep.subr.mxu0 0.0
        %696 = vmatpush1.msra.mxu0 0.0
        %697 = vmatprep.subr.mxu0 0.0
        %698 = vmatpush1.msra.mxu0 0.0
        %699 = vmatprep.subr.mxu0 0.0
        %700 = vmatpush1.msra.mxu0 0.0
        %701 = vmatprep.subr.mxu0 0.0
        %702 = vmatpush1.msra.mxu0 0.0
        %703 = vmatprep.subr.mxu0 0.0
        %704 = vmatpush1.msra.mxu0 0.0
        %705 = vmatprep.subr.mxu0 0.0
        %706 = vmatpush1.msra.mxu0 0.0
        %707 = vmatprep.subr.mxu0 0.0
        %708 = vmatpush1.msra.mxu0 0.0
        %709 = vmatprep.subr.mxu0 0.0
        %710 = vmatpush1.msra.mxu0 0.0
        %711 = vmatprep.subr.mxu0 0.0
        %712 = vmatpush1.msra.mxu0 0.0
        %713 = vmatprep.mubr.f32.mxu0 0.0
        %714 = vmatmul.mubr.f32.gmra.mrb[0].mxu0 %v647
        %v715 = vpop.f32.mrb[0].mxu0
        %v716 = vadd.f32 %v420, %v715
        %v717 = vpop.f32.mrb[0].mxu0
        %718 = vdwg.mxu0
        %v719 = vadd.f32 %v380, %v716
        %v720 = vxor.u32 %v719, 2147483648
        %v721 = vmul.f32 %v720, 1.442695
        %v722 = vpow.pop %v721
        %v723 = vadd.f32 %v722, 1.0
        %v724 = vrcp.pop %v723
        %v725 = vmul.f32 1.0, %v724
        %727 = vrot.lane.b32.xlu0 %v716, 64
        %v728 = vpop.permute.xlu0 %727
        %v730 = vmul.f32 %v725, %v728
        %732 = vrot.lane.b32.xlu0 %v730, 64
        %v733 = vpop.permute.xlu0 %732
        %v735 = vadd.f32 %v380, %v733
        %v736 = vtanh.pop %v735
        %v737 = vsub.f32 1.0, %v725
        %739 = vrot.lane.b32.xlu0 %v736, 96
        %v740 = vpop.permute.xlu0 %739
        %v742 = vmul.f32 %v737, %v740
        %v743 = vmul.f32 %v725, %v632
        %v744 = vadd.f32 %v742, %v743
        %746 = vrot.lane.b32.xlu0 %v410, 64
        %v747 = vpop.permute.xlu0 %746
        %v749 = vadd.f32 %v744, %v747
        %751 = vrot.lane.b32.xlu0 %v749, 96
        %v752 = vpop.permute.xlu0 %751
        %v754 = vsel %vm421, %v752, 0.0
        %755 = vst [vmem:[%s248 + $0x10] sm:$0xff] %v754
        %757 = vrot.lane.b32.xlu0 %v744, 96
        %v758 = vpop.permute.xlu0 %757
        %v759 = vsel %vm421, %v758, 0
        %761 = vmatprep.subr.mxu0 0.0
        %762 = vmatpush1.msra.mxu0 %v416
        %763 = vmatprep.subr.mxu0 0.0
        %764 = vmatpush1.msra.mxu0 %v417
        %765 = vmatprep.subr.mxu0 0.0
        %766 = vmatpush1.msra.mxu0 %v418
        %767 = vmatprep.subr.mxu0 0.0
        %768 = vmatpush1.msra.mxu0 %v419
        %769 = vmatprep.subr.mxu0 0.0
        %770 = vmatpush1.msra.mxu0 0.0
        %771 = vmatprep.subr.mxu0 0.0
        %772 = vmatpush1.msra.mxu0 0.0
        %773 = vmatprep.subr.mxu0 0.0
        %774 = vmatpush1.msra.mxu0 0.0
        %775 = vmatprep.subr.mxu0 0.0
        %776 = vmatpush1.msra.mxu0 0.0
        %777 = vmatprep.subr.mxu0 0.0
        %778 = vmatpush1.msra.mxu0 0.0
        %779 = vmatprep.subr.mxu0 0.0
        %780 = vmatpush1.msra.mxu0 0.0
        %781 = vmatprep.subr.mxu0 0.0
        %782 = vmatpush1.msra.mxu0 0.0
        %783 = vmatprep.subr.mxu0 0.0
        %784 = vmatpush1.msra.mxu0 0.0
        %785 = vmatprep.subr.mxu0 0.0
        %786 = vmatpush1.msra.mxu0 0.0
        %787 = vmatprep.subr.mxu0 0.0
        %788 = vmatpush1.msra.mxu0 0.0
        %789 = vmatprep.subr.mxu0 0.0
        %790 = vmatpush1.msra.mxu0 0.0
        %791 = vmatprep.subr.mxu0 0.0
        %792 = vmatpush1.msra.mxu0 0.0
        %793 = vmatprep.subr.mxu0 0.0
        %794 = vmatpush1.msra.mxu0 0.0
        %795 = vmatprep.subr.mxu0 0.0
        %796 = vmatpush1.msra.mxu0 0.0
        %797 = vmatprep.subr.mxu0 0.0
        %798 = vmatpush1.msra.mxu0 0.0
        %799 = vmatprep.subr.mxu0 0.0
        %800 = vmatpush1.msra.mxu0 0.0
        %801 = vmatprep.subr.mxu0 0.0
        %802 = vmatpush1.msra.mxu0 0.0
        %803 = vmatprep.subr.mxu0 0.0
        %804 = vmatpush1.msra.mxu0 0.0
        %805 = vmatprep.subr.mxu0 0.0
        %806 = vmatpush1.msra.mxu0 0.0
        %807 = vmatprep.subr.mxu0 0.0
        %808 = vmatpush1.msra.mxu0 0.0
        %809 = vmatprep.subr.mxu0 0.0
        %810 = vmatpush1.msra.mxu0 0.0
        %811 = vmatprep.subr.mxu0 0.0
        %812 = vmatpush1.msra.mxu0 0.0
        %813 = vmatprep.subr.mxu0 0.0
        %814 = vmatpush1.msra.mxu0 0.0
        %815 = vmatprep.subr.mxu0 0.0
        %816 = vmatpush1.msra.mxu0 0.0
        %817 = vmatprep.subr.mxu0 0.0
        %818 = vmatpush1.msra.mxu0 0.0
        %819 = vmatprep.subr.mxu0 0.0
        %820 = vmatpush1.msra.mxu0 0.0
        %821 = vmatprep.subr.mxu0 0.0
        %822 = vmatpush1.msra.mxu0 0.0
        %823 = vmatprep.subr.mxu0 0.0
        %824 = vmatpush1.msra.mxu0 0.0
        %825 = vmatprep.mubr.f32.mxu0 0.0
        %826 = vmatmul.mubr.f32.gmra.mrb[0].mxu0 %v759
        %v827 = vpop.f32.mrb[0].mxu0
        %v828 = vadd.f32 %v420, %v827
        %v829 = vpop.f32.mrb[0].mxu0
        %830 = vdwg.mxu0
        %v831 = vadd.f32 %v385, %v828
        %v832 = vxor.u32 %v831, 2147483648
        %v833 = vmul.f32 %v832, 1.442695
        %v834 = vpow.pop %v833
        %v835 = vadd.f32 %v834, 1.0
        %v836 = vrcp.pop %v835
        %v837 = vmul.f32 1.0, %v836
        %839 = vrot.lane.b32.xlu0 %v828, 64
        %v840 = vpop.permute.xlu0 %839
        %v842 = vmul.f32 %v837, %v840
        %844 = vrot.lane.b32.xlu0 %v842, 64
        %v845 = vpop.permute.xlu0 %844
        %v847 = vadd.f32 %v385, %v845
        %v848 = vtanh.pop %v847
        %v849 = vsub.f32 1.0, %v837
        %851 = vrot.lane.b32.xlu0 %v848, 96
        %v852 = vpop.permute.xlu0 %851
        %v854 = vmul.f32 %v849, %v852
        %v855 = vmul.f32 %v837, %v744
        %v856 = vadd.f32 %v854, %v855
        %858 = vrot.lane.b32.xlu0 %v411, 64
        %v859 = vpop.permute.xlu0 %858
        %v861 = vadd.f32 %v856, %v859
        %863 = vrot.lane.b32.xlu0 %v861, 96
        %v864 = vpop.permute.xlu0 %863
        %v866 = vsel %vm421, %v864, 0.0
        %867 = vst [vmem:[%s248 + $0x18] sm:$0xff] %v866
        %869 = vrot.lane.b32.xlu0 %v856, 96
        %v870 = vpop.permute.xlu0 %869
        %v871 = vsel %vm421, %v870, 0
        %873 = vmatprep.subr.mxu0 0.0
        %874 = vmatpush1.msra.mxu0 %v416
        %875 = vmatprep.subr.mxu0 0.0
        %876 = vmatpush1.msra.mxu0 %v417
        %877 = vmatprep.subr.mxu0 0.0
        %878 = vmatpush1.msra.mxu0 %v418
        %879 = vmatprep.subr.mxu0 0.0
        %880 = vmatpush1.msra.mxu0 %v419
        %881 = vmatprep.subr.mxu0 0.0
        %882 = vmatpush1.msra.mxu0 0.0
        %883 = vmatprep.subr.mxu0 0.0
        %884 = vmatpush1.msra.mxu0 0.0
        %885 = vmatprep.subr.mxu0 0.0
        %886 = vmatpush1.msra.mxu0 0.0
        %887 = vmatprep.subr.mxu0 0.0
        %888 = vmatpush1.msra.mxu0 0.0
        %889 = vmatprep.subr.mxu0 0.0
        %890 = vmatpush1.msra.mxu0 0.0
        %891 = vmatprep.subr.mxu0 0.0
        %892 = vmatpush1.msra.mxu0 0.0
        %893 = vmatprep.subr.mxu0 0.0
        %894 = vmatpush1.msra.mxu0 0.0
        %895 = vmatprep.subr.mxu0 0.0
        %896 = vmatpush1.msra.mxu0 0.0
        %897 = vmatprep.subr.mxu0 0.0
        %898 = vmatpush1.msra.mxu0 0.0
        %899 = vmatprep.subr.mxu0 0.0
        %900 = vmatpush1.msra.mxu0 0.0
        %901 = vmatprep.subr.mxu0 0.0
        %902 = vmatpush1.msra.mxu0 0.0
        %903 = vmatprep.subr.mxu0 0.0
        %904 = vmatpush1.msra.mxu0 0.0
        %905 = vmatprep.subr.mxu0 0.0
        %906 = vmatpush1.msra.mxu0 0.0
        %907 = vmatprep.subr.mxu0 0.0
        %908 = vmatpush1.msra.mxu0 0.0
        %909 = vmatprep.subr.mxu0 0.0
        %910 = vmatpush1.msra.mxu0 0.0
        %911 = vmatprep.subr.mxu0 0.0
        %912 = vmatpush1.msra.mxu0 0.0
        %913 = vmatprep.subr.mxu0 0.0
        %914 = vmatpush1.msra.mxu0 0.0
        %915 = vmatprep.subr.mxu0 0.0
        %916 = vmatpush1.msra.mxu0 0.0
        %917 = vmatprep.subr.mxu0 0.0
        %918 = vmatpush1.msra.mxu0 0.0
        %919 = vmatprep.subr.mxu0 0.0
        %920 = vmatpush1.msra.mxu0 0.0
        %921 = vmatprep.subr.mxu0 0.0
        %922 = vmatpush1.msra.mxu0 0.0
        %923 = vmatprep.subr.mxu0 0.0
        %924 = vmatpush1.msra.mxu0 0.0
        %925 = vmatprep.subr.mxu0 0.0
        %926 = vmatpush1.msra.mxu0 0.0
        %927 = vmatprep.subr.mxu0 0.0
        %928 = vmatpush1.msra.mxu0 0.0
        %929 = vmatprep.subr.mxu0 0.0
        %930 = vmatpush1.msra.mxu0 0.0
        %931 = vmatprep.subr.mxu0 0.0
        %932 = vmatpush1.msra.mxu0 0.0
        %933 = vmatprep.subr.mxu0 0.0
        %934 = vmatpush1.msra.mxu0 0.0
        %935 = vmatprep.subr.mxu0 0.0
        %936 = vmatpush1.msra.mxu0 0.0
        %937 = vmatprep.mubr.f32.mxu0 0.0
        %938 = vmatmul.mubr.f32.gmra.mrb[0].mxu0 %v871
        %v939 = vpop.f32.mrb[0].mxu0
        %v940 = vadd.f32 %v420, %v939
        %v941 = vpop.f32.mrb[0].mxu0
        %942 = vdwg.mxu0
        %v943 = vadd.f32 %v390, %v940
        %v944 = vxor.u32 %v943, 2147483648
        %v945 = vmul.f32 %v944, 1.442695
        %v946 = vpow.pop %v945
        %v947 = vadd.f32 %v946, 1.0
        %v948 = vrcp.pop %v947
        %v949 = vmul.f32 1.0, %v948
        %951 = vrot.lane.b32.xlu0 %v940, 64
        %v952 = vpop.permute.xlu0 %951
        %v954 = vmul.f32 %v949, %v952
        %956 = vrot.lane.b32.xlu0 %v954, 64
        %v957 = vpop.permute.xlu0 %956
        %v959 = vadd.f32 %v390, %v957
        %v960 = vtanh.pop %v959
        %v961 = vsub.f32 1.0, %v949
        %963 = vrot.lane.b32.xlu0 %v960, 96
        %v964 = vpop.permute.xlu0 %963
        %v966 = vmul.f32 %v961, %v964
        %v967 = vmul.f32 %v949, %v856
        %v968 = vadd.f32 %v966, %v967
        %970 = vrot.lane.b32.xlu0 %v412, 64
        %v971 = vpop.permute.xlu0 %970
        %v973 = vadd.f32 %v968, %v971
        %975 = vrot.lane.b32.xlu0 %v973, 96
        %v976 = vpop.permute.xlu0 %975
        %v978 = vsel %vm421, %v976, 0.0
        %979 = vst [vmem:[%s248 + $0x20] sm:$0xff] %v978
        %981 = vrot.lane.b32.xlu0 %v968, 96
        %v982 = vpop.permute.xlu0 %981
        %v983 = vsel %vm421, %v982, 0
        %985 = vmatprep.subr.mxu0 0.0
        %986 = vmatpush1.msra.mxu0 %v416
        %987 = vmatprep.subr.mxu0 0.0
        %988 = vmatpush1.msra.mxu0 %v417
        %989 = vmatprep.subr.mxu0 0.0
        %990 = vmatpush1.msra.mxu0 %v418
        %991 = vmatprep.subr.mxu0 0.0
        %992 = vmatpush1.msra.mxu0 %v419
        %993 = vmatprep.subr.mxu0 0.0
        %994 = vmatpush1.msra.mxu0 0.0
        %995 = vmatprep.subr.mxu0 0.0
        %996 = vmatpush1.msra.mxu0 0.0
        %997 = vmatprep.subr.mxu0 0.0
        %998 = vmatpush1.msra.mxu0 0.0
        %999 = vmatprep.subr.mxu0 0.0
        %1000 = vmatpush1.msra.mxu0 0.0
        %1001 = vmatprep.subr.mxu0 0.0
        %1002 = vmatpush1.msra.mxu0 0.0
        %1003 = vmatprep.subr.mxu0 0.0
        %1004 = vmatpush1.msra.mxu0 0.0
        %1005 = vmatprep.subr.mxu0 0.0
        %1006 = vmatpush1.msra.mxu0 0.0
        %1007 = vmatprep.subr.mxu0 0.0
        %1008 = vmatpush1.msra.mxu0 0.0
        %1009 = vmatprep.subr.mxu0 0.0
        %1010 = vmatpush1.msra.mxu0 0.0
        %1011 = vmatprep.subr.mxu0 0.0
        %1012 = vmatpush1.msra.mxu0 0.0
        %1013 = vmatprep.subr.mxu0 0.0
        %1014 = vmatpush1.msra.mxu0 0.0
        %1015 = vmatprep.subr.mxu0 0.0
        %1016 = vmatpush1.msra.mxu0 0.0
        %1017 = vmatprep.subr.mxu0 0.0
        %1018 = vmatpush1.msra.mxu0 0.0
        %1019 = vmatprep.subr.mxu0 0.0
        %1020 = vmatpush1.msra.mxu0 0.0
        %1021 = vmatprep.subr.mxu0 0.0
        %1022 = vmatpush1.msra.mxu0 0.0
        %1023 = vmatprep.subr.mxu0 0.0
        %1024 = vmatpush1.msra.mxu0 0.0
        %1025 = vmatprep.subr.mxu0 0.0
        %1026 = vmatpush1.msra.mxu0 0.0
        %1027 = vmatprep.subr.mxu0 0.0
        %1028 = vmatpush1.msra.mxu0 0.0
        %1029 = vmatprep.subr.mxu0 0.0
        %1030 = vmatpush1.msra.mxu0 0.0
        %1031 = vmatprep.subr.mxu0 0.0
        %1032 = vmatpush1.msra.mxu0 0.0
        %1033 = vmatprep.subr.mxu0 0.0
        %1034 = vmatpush1.msra.mxu0 0.0
        %1035 = vmatprep.subr.mxu0 0.0
        %1036 = vmatpush1.msra.mxu0 0.0
        %1037 = vmatprep.subr.mxu0 0.0
        %1038 = vmatpush1.msra.mxu0 0.0
        %1039 = vmatprep.subr.mxu0 0.0
        %1040 = vmatpush1.msra.mxu0 0.0
        %1041 = vmatprep.subr.mxu0 0.0
        %1042 = vmatpush1.msra.mxu0 0.0
        %1043 = vmatprep.subr.mxu0 0.0
        %1044 = vmatpush1.msra.mxu0 0.0
        %1045 = vmatprep.subr.mxu0 0.0
        %1046 = vmatpush1.msra.mxu0 0.0
        %1047 = vmatprep.subr.mxu0 0.0
        %1048 = vmatpush1.msra.mxu0 0.0
        %1049 = vmatprep.mubr.f32.mxu0 0.0
        %1050 = vmatmul.mubr.f32.gmra.mrb[0].mxu0 %v983
        %v1051 = vpop.f32.mrb[0].mxu0
        %v1052 = vadd.f32 %v420, %v1051
        %v1053 = vpop.f32.mrb[0].mxu0
        %1054 = vdwg.mxu0
        %v1055 = vadd.f32 %v395, %v1052
        %v1056 = vxor.u32 %v1055, 2147483648
        %v1057 = vmul.f32 %v1056, 1.442695
        %v1058 = vpow.pop %v1057
        %v1059 = vadd.f32 %v1058, 1.0
        %v1060 = vrcp.pop %v1059
        %v1061 = vmul.f32 1.0, %v1060
        %1063 = vrot.lane.b32.xlu0 %v1052, 64
        %v1064 = vpop.permute.xlu0 %1063
        %v1066 = vmul.f32 %v1061, %v1064
        %1068 = vrot.lane.b32.xlu0 %v1066, 64
        %v1069 = vpop.permute.xlu0 %1068
        %v1071 = vadd.f32 %v395, %v1069
        %v1072 = vtanh.pop %v1071
        %v1073 = vsub.f32 1.0, %v1061
        %1075 = vrot.lane.b32.xlu0 %v1072, 96
        %v1076 = vpop.permute.xlu0 %1075
        %v1078 = vmul.f32 %v1073, %v1076
        %v1079 = vmul.f32 %v1061, %v968
        %v1080 = vadd.f32 %v1078, %v1079
        %1082 = vrot.lane.b32.xlu0 %v413, 64
        %v1083 = vpop.permute.xlu0 %1082
        %v1085 = vadd.f32 %v1080, %v1083
        %1087 = vrot.lane.b32.xlu0 %v1085, 96
        %v1088 = vpop.permute.xlu0 %1087
        %v1090 = vsel %vm421, %v1088, 0.0
        %1091 = vst [vmem:[%s248 + $0x28] sm:$0xff] %v1090
        %1093 = vrot.lane.b32.xlu0 %v1080, 96
        %v1094 = vpop.permute.xlu0 %1093
        %v1095 = vsel %vm421, %v1094, 0
        %1097 = vmatprep.subr.mxu0 0.0
        %1098 = vmatpush1.msra.mxu0 %v416
        %1099 = vmatprep.subr.mxu0 0.0
        %1100 = vmatpush1.msra.mxu0 %v417
        %1101 = vmatprep.subr.mxu0 0.0
        %1102 = vmatpush1.msra.mxu0 %v418
        %1103 = vmatprep.subr.mxu0 0.0
        %1104 = vmatpush1.msra.mxu0 %v419
        %1105 = vmatprep.subr.mxu0 0.0
        %1106 = vmatpush1.msra.mxu0 0.0
        %1107 = vmatprep.subr.mxu0 0.0
        %1108 = vmatpush1.msra.mxu0 0.0
        %1109 = vmatprep.subr.mxu0 0.0
        %1110 = vmatpush1.msra.mxu0 0.0
        %1111 = vmatprep.subr.mxu0 0.0
        %1112 = vmatpush1.msra.mxu0 0.0
        %1113 = vmatprep.subr.mxu0 0.0
        %1114 = vmatpush1.msra.mxu0 0.0
        %1115 = vmatprep.subr.mxu0 0.0
        %1116 = vmatpush1.msra.mxu0 0.0
        %1117 = vmatprep.subr.mxu0 0.0
        %1118 = vmatpush1.msra.mxu0 0.0
        %1119 = vmatprep.subr.mxu0 0.0
        %1120 = vmatpush1.msra.mxu0 0.0
        %1121 = vmatprep.subr.mxu0 0.0
        %1122 = vmatpush1.msra.mxu0 0.0
        %1123 = vmatprep.subr.mxu0 0.0
        %1124 = vmatpush1.msra.mxu0 0.0
        %1125 = vmatprep.subr.mxu0 0.0
        %1126 = vmatpush1.msra.mxu0 0.0
        %1127 = vmatprep.subr.mxu0 0.0
        %1128 = vmatpush1.msra.mxu0 0.0
        %1129 = vmatprep.subr.mxu0 0.0
        %1130 = vmatpush1.msra.mxu0 0.0
        %1131 = vmatprep.subr.mxu0 0.0
        %1132 = vmatpush1.msra.mxu0 0.0
        %1133 = vmatprep.subr.mxu0 0.0
        %1134 = vmatpush1.msra.mxu0 0.0
        %1135 = vmatprep.subr.mxu0 0.0
        %1136 = vmatpush1.msra.mxu0 0.0
        %1137 = vmatprep.subr.mxu0 0.0
        %1138 = vmatpush1.msra.mxu0 0.0
        %1139 = vmatprep.subr.mxu0 0.0
        %1140 = vmatpush1.msra.mxu0 0.0
        %1141 = vmatprep.subr.mxu0 0.0
        %1142 = vmatpush1.msra.mxu0 0.0
        %1143 = vmatprep.subr.mxu0 0.0
        %1144 = vmatpush1.msra.mxu0 0.0
        %1145 = vmatprep.subr.mxu0 0.0
        %1146 = vmatpush1.msra.mxu0 0.0
        %1147 = vmatprep.subr.mxu0 0.0
        %1148 = vmatpush1.msra.mxu0 0.0
        %1149 = vmatprep.subr.mxu0 0.0
        %1150 = vmatpush1.msra.mxu0 0.0
        %1151 = vmatprep.subr.mxu0 0.0
        %1152 = vmatpush1.msra.mxu0 0.0
        %1153 = vmatprep.subr.mxu0 0.0
        %1154 = vmatpush1.msra.mxu0 0.0
        %1155 = vmatprep.subr.mxu0 0.0
        %1156 = vmatpush1.msra.mxu0 0.0
        %1157 = vmatprep.subr.mxu0 0.0
        %1158 = vmatpush1.msra.mxu0 0.0
        %1159 = vmatprep.subr.mxu0 0.0
        %1160 = vmatpush1.msra.mxu0 0.0
        %1161 = vmatprep.mubr.f32.mxu0 0.0
        %1162 = vmatmul.mubr.f32.gmra.mrb[0].mxu0 %v1095
        %v1163 = vpop.f32.mrb[0].mxu0
        %v1164 = vadd.f32 %v420, %v1163
        %v1165 = vpop.f32.mrb[0].mxu0
        %1166 = vdwg.mxu0
        %v1167 = vadd.f32 %v400, %v1164
        %v1168 = vxor.u32 %v1167, 2147483648
        %v1169 = vmul.f32 %v1168, 1.442695
        %v1170 = vpow.pop %v1169
        %v1171 = vadd.f32 %v1170, 1.0
        %v1172 = vrcp.pop %v1171
        %v1173 = vmul.f32 1.0, %v1172
        %1175 = vrot.lane.b32.xlu0 %v1164, 64
        %v1176 = vpop.permute.xlu0 %1175
        %v1178 = vmul.f32 %v1173, %v1176
        %1180 = vrot.lane.b32.xlu0 %v1178, 64
        %v1181 = vpop.permute.xlu0 %1180
        %v1183 = vadd.f32 %v400, %v1181
        %v1184 = vtanh.pop %v1183
        %v1185 = vsub.f32 1.0, %v1173
        %1187 = vrot.lane.b32.xlu0 %v1184, 96
        %v1188 = vpop.permute.xlu0 %1187
        %v1190 = vmul.f32 %v1185, %v1188
        %v1191 = vmul.f32 %v1173, %v1080
        %v1192 = vadd.f32 %v1190, %v1191
        %1194 = vrot.lane.b32.xlu0 %v414, 64
        %v1195 = vpop.permute.xlu0 %1194
        %v1197 = vadd.f32 %v1192, %v1195
        %1199 = vrot.lane.b32.xlu0 %v1197, 96
        %v1200 = vpop.permute.xlu0 %1199
        %v1202 = vsel %vm421, %v1200, 0.0
        %1203 = vst [vmem:[%s248 + $0x30] sm:$0xff] %v1202
        %1205 = vrot.lane.b32.xlu0 %v1192, 96
        %v1206 = vpop.permute.xlu0 %1205
        %v1207 = vsel %vm421, %v1206, 0
        %1209 = vmatprep.subr.mxu0 0.0
        %1210 = vmatpush1.msra.mxu0 %v416
        %1211 = vmatprep.subr.mxu0 0.0
        %1212 = vmatpush1.msra.mxu0 %v417
        %1213 = vmatprep.subr.mxu0 0.0
        %1214 = vmatpush1.msra.mxu0 %v418
        %1215 = vmatprep.subr.mxu0 0.0
        %1216 = vmatpush1.msra.mxu0 %v419
        %1217 = vmatprep.subr.mxu0 0.0
        %1218 = vmatpush1.msra.mxu0 0.0
        %1219 = vmatprep.subr.mxu0 0.0
        %1220 = vmatpush1.msra.mxu0 0.0
        %1221 = vmatprep.subr.mxu0 0.0
        %1222 = vmatpush1.msra.mxu0 0.0
        %1223 = vmatprep.subr.mxu0 0.0
        %1224 = vmatpush1.msra.mxu0 0.0
        %1225 = vmatprep.subr.mxu0 0.0
        %1226 = vmatpush1.msra.mxu0 0.0
        %1227 = vmatprep.subr.mxu0 0.0
        %1228 = vmatpush1.msra.mxu0 0.0
        %1229 = vmatprep.subr.mxu0 0.0
        %1230 = vmatpush1.msra.mxu0 0.0
        %1231 = vmatprep.subr.mxu0 0.0
        %1232 = vmatpush1.msra.mxu0 0.0
        %1233 = vmatprep.subr.mxu0 0.0
        %1234 = vmatpush1.msra.mxu0 0.0
        %1235 = vmatprep.subr.mxu0 0.0
        %1236 = vmatpush1.msra.mxu0 0.0
        %1237 = vmatprep.subr.mxu0 0.0
        %1238 = vmatpush1.msra.mxu0 0.0
        %1239 = vmatprep.subr.mxu0 0.0
        %1240 = vmatpush1.msra.mxu0 0.0
        %1241 = vmatprep.subr.mxu0 0.0
        %1242 = vmatpush1.msra.mxu0 0.0
        %1243 = vmatprep.subr.mxu0 0.0
        %1244 = vmatpush1.msra.mxu0 0.0
        %1245 = vmatprep.subr.mxu0 0.0
        %1246 = vmatpush1.msra.mxu0 0.0
        %1247 = vmatprep.subr.mxu0 0.0
        %1248 = vmatpush1.msra.mxu0 0.0
        %1249 = vmatprep.subr.mxu0 0.0
        %1250 = vmatpush1.msra.mxu0 0.0
        %1251 = vmatprep.subr.mxu0 0.0
        %1252 = vmatpush1.msra.mxu0 0.0
        %1253 = vmatprep.subr.mxu0 0.0
        %1254 = vmatpush1.msra.mxu0 0.0
        %1255 = vmatprep.subr.mxu0 0.0
        %1256 = vmatpush1.msra.mxu0 0.0
        %1257 = vmatprep.subr.mxu0 0.0
        %1258 = vmatpush1.msra.mxu0 0.0
        %1259 = vmatprep.subr.mxu0 0.0
        %1260 = vmatpush1.msra.mxu0 0.0
        %1261 = vmatprep.subr.mxu0 0.0
        %1262 = vmatpush1.msra.mxu0 0.0
        %1263 = vmatprep.subr.mxu0 0.0
        %1264 = vmatpush1.msra.mxu0 0.0
        %1265 = vmatprep.subr.mxu0 0.0
        %1266 = vmatpush1.msra.mxu0 0.0
        %1267 = vmatprep.subr.mxu0 0.0
        %1268 = vmatpush1.msra.mxu0 0.0
        %1269 = vmatprep.subr.mxu0 0.0
        %1270 = vmatpush1.msra.mxu0 0.0
        %1271 = vmatprep.subr.mxu0 0.0
        %1272 = vmatpush1.msra.mxu0 0.0
        %1273 = vmatprep.mubr.f32.mxu0 0.0
        %1274 = vmatmul.mubr.f32.gmra.mrb[0].mxu0 %v1207
        %v1275 = vpop.f32.mrb[0].mxu0
        %v1276 = vadd.f32 %v420, %v1275
        %v1277 = vpop.f32.mrb[0].mxu0
        %1278 = vdwg.mxu0
        %v1279 = vadd.f32 %v405, %v1276
        %v1280 = vxor.u32 %v1279, 2147483648
        %v1281 = vmul.f32 %v1280, 1.442695
        %v1282 = vpow.pop %v1281
        %v1283 = vadd.f32 %v1282, 1.0
        %v1284 = vrcp.pop %v1283
        %v1285 = vmul.f32 1.0, %v1284
        %1287 = vrot.lane.b32.xlu0 %v1276, 64
        %v1288 = vpop.permute.xlu0 %1287
        %v1290 = vmul.f32 %v1285, %v1288
        %1292 = vrot.lane.b32.xlu0 %v1290, 64
        %v1293 = vpop.permute.xlu0 %1292
        %v1295 = vadd.f32 %v405, %v1293
        %v1296 = vtanh.pop %v1295
        %v1297 = vsub.f32 1.0, %v1285
        %1299 = vrot.lane.b32.xlu0 %v1296, 96
        %v1300 = vpop.permute.xlu0 %1299
        %v1302 = vmul.f32 %v1297, %v1300
        %v1303 = vmul.f32 %v1285, %v1192
        %v1304 = vadd.f32 %v1302, %v1303
        %1306 = vrot.lane.b32.xlu0 %v415, 64
        %v1307 = vpop.permute.xlu0 %1306
        %v1309 = vadd.f32 %v1304, %v1307
        %1311 = vrot.lane.b32.xlu0 %v1309, 96
        %v1312 = vpop.permute.xlu0 %1311
        %v1314 = vsel %vm421, %v1312, 0.0
        %1315 = vst [vmem:[%s248 + $0x38] sm:$0xff] %v1314
        %1317 = vrot.lane.b32.xlu0 %v1304, 96
        %v1318 = vpop.permute.xlu0 %1317
        %v1320 = vsel %vm421, %v1318, 0.0
        %1321 = vst [vmem:[%s255] sm:$0xff] %v1320
        %s1322 = sand.u32 %s142, 1
        %s1323 = scalar_lea.sflag [#allocation3], %s1322
        %s1324 = sand.u32 %s142, 1
        %s1325 = smul.addr %s1324, 64
        %s1326 = scalar_lea.vmem [#allocation2], %s1325
        %s1327 = sand.u32 %s168, 1
        %s1328 = scalar_lea.sflag [#allocation5], %s1327
        %s1329 = sand.u32 %s168, 1
        %s1330 = smul.addr %s1329, 8
        %s1331 = scalar_lea.vmem [#allocation4], %s1330
        // Predicated region
        $region41: #{tpu_custom_call.1} parent=39 // pred_check
          %p1332 = pneg %p152
        $region42: #{tpu_custom_call.1} parent=39 // pred_check_branch
          %1334 = sbr.rel (%p1332) target = $region44
        $region43: #{tpu_custom_call.1} parent=39 // pred_region
          %s1336 = ssub.s32 1024, 1024
          %1337 = vsyncadd %s1323, %s1336
          %s1338 = smul.addr %s24, 8
          %s1339 = smul.addr %s1338, 128
          %s1340 = scalar_lea.hbm %s5, %s1339
          %s1341 = sshll.u32 %s1326, 4
          %s1342 = int_to_ptr.vmem [resolvable:$true] %s1341
          %1347 = dma.vmem_to_hbm [thread:$0]  %s1342, 1024, %s1340, %s1323, 128, 128, 8
        $region44: #{tpu_custom_call.1} parent=39 // pred_fallthru
          _
        // Predicated region
        $region45: #{tpu_custom_call.1} parent=39 // pred_check
          %p1348 = pneg %p178
        $region46: #{tpu_custom_call.1} parent=39 // pred_check_branch
          %1350 = sbr.rel (%p1348) target = $region48
        $region47: #{tpu_custom_call.1} parent=39 // pred_region
          %s1352 = ssub.s32 128, 128
          %1353 = vsyncadd %s1328, %s1352
          %s1354 = smul.addr %s24, 128
          %s1355 = scalar_lea.hbm %s6, %s1354
          %s1357 = sshll.u32 %s1331, 4
          %s1358 = int_to_ptr.vmem [resolvable:$true] %s1357
          %1360 = dma.vmem_to_hbm [thread:$0]  %s1358, 128, %s1355, %s1328
        $region48: #{tpu_custom_call.1} parent=39 // pred_fallthru
          _
      $region40: #{tpu_custom_call.1} parent=5 // pred_fallthru
        _
      %p1361 = scmp.le.s32.totalorder 2, %s19
      // Predicated region
      $region49: #{tpu_custom_call.1} parent=5 // pred_check
        %p1362 = pneg %p1361
      $region50: #{tpu_custom_call.1} parent=5 // pred_check_branch
        %1364 = sbr.rel (%p1362) target = $region52
      $region51: #{tpu_custom_call.1} parent=5 // pred_region
        %s1365 = ssub.s32 %s19, 2
        // Predicated region
        $region53: #{tpu_custom_call.1} parent=51 // pred_check
          %p1366 = pneg %p158
        $region54: #{tpu_custom_call.1} parent=51 // pred_check_branch
          %1368 = sbr.rel (%p1366) target = $region56
        $region55: #{tpu_custom_call.1} parent=51 // pred_region
          %s1369 = sand.u32 %s143, 1
          %s1370 = scalar_lea.sflag [#allocation3], %s1369
          %s1371 = sand.u32 %s143, 1
          %s1372 = smul.addr %s1371, 64
          %s1373 = scalar_lea.vmem [#allocation2], %s1372
          %1374 = dma.done %s1370, 1024
        $region56: #{tpu_custom_call.1} parent=51 // pred_fallthru
          _
        // Predicated region
        $region57: #{tpu_custom_call.1} parent=51 // pred_check
          %p1375 = pneg %p184
        $region58: #{tpu_custom_call.1} parent=51 // pred_check_branch
          %1377 = sbr.rel (%p1375) target = $region60
        $region59: #{tpu_custom_call.1} parent=51 // pred_region
          %s1378 = sand.u32 %s169, 1
          %s1379 = scalar_lea.sflag [#allocation5], %s1378
          %s1380 = sand.u32 %s169, 1
          %s1381 = smul.addr %s1380, 8
          %s1382 = scalar_lea.vmem [#allocation4], %s1381
          %1383 = dma.done %s1379, 128
        $region60: #{tpu_custom_call.1} parent=51 // pred_fallthru
          _
      $region52: #{tpu_custom_call.1} parent=5 // pred_fallthru
        _
    $region6: #{tpu_custom_call.1} parent=1 // loop_footer
      %s23 = sadd.s32 1, %s19
    $region7: #{tpu_custom_call.1} parent=1 // loop_footer_branch
      %18 = sbr.rel target = $region3
    $region8: #{tpu_custom_call.1} parent=1 // loop_exit
      _
    %1384 = vsyncpa [#allocation3], 1
    %s1385 = scalar_lea.sflag [#allocation3], 1
    %1386 = vsyncpa %s1385, 1
    %1387 = vsyncpa [#allocation5], 1
    %s1388 = scalar_lea.sflag [#allocation5], 1
    %1389 = vsyncpa %s1388, 1

</llo_original>
